<compile_context>
chip_gen: v7x
topology: tpu7x:2x2x1
jax: 0.10.0
libtpu: 0.0.40
codegen_flags: <defaults>
</compile_context>

<pallas_src>
import jax
import jax.numpy as jnp
from jax.experimental import pallas as pl
from jax.experimental.pallas import tpu as pltpu


def channelmix_kernel(x_ref, w1_ref, b1_ref, w2_ref, b2_ref, o_ref):
    # x_ref / o_ref: (C, TN) tile — channels on sublanes, points on lanes.
    # w1_ref / w2_ref: (C, C) folded 1x1-conv weights (f32 or bf16).
    # b1_ref / b2_ref: (C, 1) folded biases (f32), broadcast along lanes.
    x = x_ref[...]                                               # (C, TN) f32

    # mlp[0] with BN folded in: h = W1' @ x + b1'
    h = jnp.dot(w1_ref[...], x.astype(w1_ref.dtype),
                preferred_element_type=jnp.float32) + b1_ref[...]
    h = jnp.maximum(h, 0.0)                                      # ReLU (f32)

    # mlp[2] with the depthwise scale folded in: h = W2' @ h + b2'
    h = jnp.dot(w2_ref[...], h.astype(w2_ref.dtype),
                preferred_element_type=jnp.float32) + b2_ref[...]

    # residual add (DropPath is identity in eval mode)
    o_ref[...] = (x + h).astype(o_ref.dtype)


def _choose_tile_n(N, C, w_bytes, target_tile_n, budget_bytes=24 << 20):
    """Largest multiple-of-128 tile (<= target) whose VMEM footprint fits."""
    if N % 128 != 0:
        # Last-dim blocks must be a multiple of 128 or span the whole axis.
        return N

    def need(tn):
        return (2 * 2 * tn * C * 4          # x / out tiles, double-buffered
                + 2 * 2 * C * C * w_bytes   # W1' / W2' blocks (double-buffered)
                + 2 * 2 * C * 4)            # biases

    tn = max(128, (min(target_tile_n, N) // 128) * 128)
    while tn > 128 and need(tn) > budget_bytes:
        tn -= 128
    return tn


def channel_mix_forward(tokens_bcn, params, *, tile_n=1024,
                        mxu_dtype=jnp.float32):
    """tokens_bcn: (B, C, N) float32, PyTorch NCL layout. Returns (B, C, N)."""
    B, C, N = tokens_bcn.shape

    # ---- Fold BN + scale into the 1x1-conv weights (== ChannelMix.compress) --
    eps = 1e-5
    a = params["bn_gamma"] / jnp.sqrt(params["bn_running_var"] + eps)    # (C,)
    bshift = params["bn_beta"] - a * params["bn_running_mean"]           # (C,)
    w1 = params["w1"][:, :, 0]                                           # (C, C)
    w2 = params["w2"][:, :, 0]                                           # (C, C)
    s = params["scale_w"][:, 0, 0]                                       # (C,)

    w1f = (w1 * a[None, :]).astype(mxu_dtype)                            # (C, C)
    b1f = (w1 @ bshift + params["b1"]).reshape(C, 1).astype(jnp.float32)
    w2f = (w2 * s[:, None]).astype(mxu_dtype)                            # (C, C)
    b2f = (params["b2"] * s).reshape(C, 1).astype(jnp.float32)

    # ---- Tiling along N (lane axis) ------------------------------------------
    w_bytes = jnp.dtype(mxu_dtype).itemsize
    tile_n = _choose_tile_n(N, C, w_bytes, tile_n)
    grid = (B, pl.cdiv(N, tile_n))

    x_spec = pl.BlockSpec((None, C, tile_n), lambda b, j: (b, 0, j))
    mat_spec = pl.BlockSpec((C, C), lambda b, j: (0, 0))
    col_spec = pl.BlockSpec((C, 1), lambda b, j: (0, 0))

    # Explicit VMEM budget (v7x: 64 MiB physical, 32 MiB scoped default).
    need = (2 * 2 * tile_n * C * 4          # x / out tiles, double-buffered
            + 2 * 2 * C * C * w_bytes       # W1' / W2' blocks
            + 2 * 2 * C * 4)                # biases
    vmem_limit = int(min(48 * 1024 * 1024, max(16 * 1024 * 1024, 2 * need)))

    return pl.pallas_call(
        channelmix_kernel,
        out_shape=jax.ShapeDtypeStruct((B, C, N), tokens_bcn.dtype),
        grid_spec=pltpu.PrefetchScalarGridSpec(
            num_scalar_prefetch=0,
            grid=grid,
            in_specs=[x_spec, mat_spec, col_spec, mat_spec, col_spec],
            out_specs=x_spec,
        ),
        compiler_params=pltpu.CompilerParams(
            dimension_semantics=("parallel", "parallel"),
            vmem_limit_bytes=vmem_limit),
    )(tokens_bcn, w1f, b1f, w2f, b2f)


def init_params(key, channels):
    """Deterministic synthetic parameters matching ChannelMix.__init__ shapes."""
    k = jax.random.split(key, 9)
    C = channels
    return {
        # BatchNorm1d(C)
        "bn_gamma": jax.random.uniform(k[0], (C,), jnp.float32, 0.5, 1.5),
        "bn_beta": jax.random.normal(k[1], (C,), jnp.float32) * 0.1,
        "bn_running_mean": jax.random.normal(k[2], (C,), jnp.float32) * 0.1,
        "bn_running_var": jax.random.uniform(k[3], (C,), jnp.float32, 0.5, 1.5),
        # mlp[0]: Conv1d(C, C, 1)
        "w1": jax.random.normal(k[4], (C, C, 1), jnp.float32) * (1.0 / C ** 0.5),
        "b1": jax.random.normal(k[5], (C,), jnp.float32) * 0.01,
        # mlp[2]: Conv1d(C, C, 1)
        "w2": jax.random.normal(k[6], (C, C, 1), jnp.float32) * (1.0 / C ** 0.5),
        "b2": jax.random.normal(k[7], (C,), jnp.float32) * 0.01,
        # scale: Conv1d(C, C, 1, bias=False, groups=C)
        "scale_w": jax.random.uniform(k[8], (C, 1, 1), jnp.float32, 0.9, 1.1),
    }


def channel_mix_reference(tokens_bcn, params):
    """Pure-JAX reference of the PyTorch forward (eval mode, un-compressed)."""
    eps = 1e-5
    a = params["bn_gamma"] / jnp.sqrt(params["bn_running_var"] + eps)
    b = params["bn_beta"] - a * params["bn_running_mean"]
    y = tokens_bcn * a[None, :, None] + b[None, :, None]
    w1 = params["w1"][:, :, 0]
    w2 = params["w2"][:, :, 0]
    h = jnp.einsum("oc,bcn->bon", w1, y) + params["b1"][None, :, None]
    h = jnp.maximum(h, 0.0)
    h = jnp.einsum("oc,bcn->bon", w2, h) + params["b2"][None, :, None]
    h = h * params["scale_w"][:, 0, 0][None, :, None]
    return tokens_bcn + h


if __name__ == "__main__":
    B, C, N = 2, 64, 1024  # small: 2 point clouds, 64 channels, 1024 points
    key = jax.random.PRNGKey(0)
    kx, kp = jax.random.split(key)
    tokens = jax.random.normal(kx, (B, C, N), jnp.float32)
    params = init_params(kp, C)

    ref = channel_mix_reference(tokens, params)

    # f32 MXU path (BN/scale folding only perturbs rounding slightly).
    out = jax.block_until_ready(channel_mix_forward(tokens, params))
    assert out.shape == (B, C, N)
    assert jnp.allclose(out, ref, atol=1e-3, rtol=1e-3), "f32 mismatch vs reference"

    # bf16 MXU operands (recommended on v6e/v7x); f32 accumulation, looser tol.
    out_bf16 = jax.block_until_ready(
        channel_mix_forward(tokens, params, mxu_dtype=jnp.bfloat16))
    assert jnp.allclose(out_bf16, ref, atol=1e-1, rtol=5e-2), "bf16 mismatch vs reference"

    print("KERNEL_OK")
</pallas_src>

<mosaic_0001>
module attributes {stable_mosaic.version = 11 : i64} {
  func.func @channelmix_kernel(%arg0: i32, %arg1: i32, %arg2: memref<1x64x1024xf32, #tpu.memory_space<vmem>>, %arg3: memref<64x64xf32, #tpu.memory_space<vmem>>, %arg4: memref<64x1xf32, #tpu.memory_space<vmem>>, %arg5: memref<64x64xf32, #tpu.memory_space<vmem>>, %arg6: memref<64x1xf32, #tpu.memory_space<vmem>>, %arg7: memref<1x64x1024xf32, #tpu.memory_space<vmem>>) attributes {dimension_semantics = [#tpu.dimension_semantics<parallel>, #tpu.dimension_semantics<parallel>], iteration_bounds = array<i64: 2, 1>, scalar_prefetch = 0 : i64, scratch_operands = 0 : i64, tpu.core_type = #tpu.core_type<tc>, window_params = [{transform_indices = @transform_0, window_bounds = array<i64: 1, 64, 1024>}, {pipeline_mode = #tpu.pipeline_mode<synchronous>, transform_indices = @transform_1, window_bounds = array<i64: 64, 64>}, {pipeline_mode = #tpu.pipeline_mode<synchronous>, transform_indices = @transform_2, window_bounds = array<i64: 64, 1>}, {pipeline_mode = #tpu.pipeline_mode<synchronous>, transform_indices = @transform_3, window_bounds = array<i64: 64, 64>}, {pipeline_mode = #tpu.pipeline_mode<synchronous>, transform_indices = @transform_4, window_bounds = array<i64: 64, 1>}, {transform_indices = @transform_5, window_bounds = array<i64: 1, 64, 1024>}]} {
    %c0 = arith.constant 0 : index
    %c0_0 = arith.constant 0 : index
    %c0_1 = arith.constant 0 : index
    %0 = vector.load %arg2[%c0, %c0_0, %c0_1] : memref<1x64x1024xf32, #tpu.memory_space<vmem>>, vector<1x64x1024xf32>
    %1 = vector.shape_cast %0 : vector<1x64x1024xf32> to vector<64x1024xf32>
    %c0_2 = arith.constant 0 : index
    %c0_3 = arith.constant 0 : index
    %2 = vector.load %arg3[%c0_2, %c0_3] : memref<64x64xf32, #tpu.memory_space<vmem>>, vector<64x64xf32>
    %cst = arith.constant dense<0.000000e+00> : vector<64x1024xf32>
    %3 = tpu.matmul %2, %1, %cst {dimension_numbers = #tpu.dot_dimension_numbers<[1], [0], [0], [1], [0, 0, 1, 1], [], []>} : vector<64x64xf32>, vector<64x1024xf32>, vector<64x1024xf32> -> vector<64x1024xf32>
    %c0_4 = arith.constant 0 : index
    %c0_5 = arith.constant 0 : index
    %4 = vector.load %arg4[%c0_4, %c0_5] : memref<64x1xf32, #tpu.memory_space<vmem>>, vector<64x1xf32>
    %5 = vector.broadcast %4 : vector<64x1xf32> to vector<64x1024xf32>
    %6 = arith.addf %3, %5 : vector<64x1024xf32>
    %cst_6 = arith.constant 0.000000e+00 : f32
    %7 = vector.broadcast %cst_6 : f32 to vector<64x1024xf32>
    %8 = arith.maximumf %6, %7 : vector<64x1024xf32>
    %c0_7 = arith.constant 0 : index
    %c0_8 = arith.constant 0 : index
    %9 = vector.load %arg5[%c0_7, %c0_8] : memref<64x64xf32, #tpu.memory_space<vmem>>, vector<64x64xf32>
    %cst_9 = arith.constant dense<0.000000e+00> : vector<64x1024xf32>
    %10 = tpu.matmul %9, %8, %cst_9 {dimension_numbers = #tpu.dot_dimension_numbers<[1], [0], [0], [1], [0, 0, 1, 1], [], []>} : vector<64x64xf32>, vector<64x1024xf32>, vector<64x1024xf32> -> vector<64x1024xf32>
    %c0_10 = arith.constant 0 : index
    %c0_11 = arith.constant 0 : index
    %11 = vector.load %arg6[%c0_10, %c0_11] : memref<64x1xf32, #tpu.memory_space<vmem>>, vector<64x1xf32>
    %12 = vector.broadcast %11 : vector<64x1xf32> to vector<64x1024xf32>
    %13 = arith.addf %10, %12 : vector<64x1024xf32>
    %14 = arith.addf %1, %13 : vector<64x1024xf32>
    %c0_12 = arith.constant 0 : index
    %c0_13 = arith.constant 0 : index
    %c0_14 = arith.constant 0 : index
    %15 = vector.load %arg7[%c0_12, %c0_13, %c0_14] : memref<1x64x1024xf32, #tpu.memory_space<vmem>>, vector<1x64x1024xf32>
    %16 = vector.shape_cast %15 : vector<1x64x1024xf32> to vector<64x1024xf32>
    %17 = vector.shape_cast %14 : vector<64x1024xf32> to vector<1x64x1024xf32>
    tpu.vector_store %arg7[%c0_12, %c0_13, %c0_14], %17 {strides = array<i32>} : memref<1x64x1024xf32, #tpu.memory_space<vmem>>, vector<1x64x1024xf32>,
    return
  }
  func.func @transform_0(%arg0: i32, %arg1: i32) -> (i32, i32, i32) {
    %c0_i32 = arith.constant 0 : i32
    %c0_i32_0 = arith.constant 0 : i32
    return %arg0, %c0_i32, %arg1 : i32, i32, i32
  }
  func.func @transform_1(%arg0: i32, %arg1: i32) -> (i32, i32) {
    %c0_i32 = arith.constant 0 : i32
    %c0_i32_0 = arith.constant 0 : i32
    %c0_i32_1 = arith.constant 0 : i32
    return %c0_i32, %c0_i32_0 : i32, i32
  }
  func.func @transform_2(%arg0: i32, %arg1: i32) -> (i32, i32) {
    %c0_i32 = arith.constant 0 : i32
    %c0_i32_0 = arith.constant 0 : i32
    %c0_i32_1 = arith.constant 0 : i32
    return %c0_i32, %c0_i32_0 : i32, i32
  }
  func.func @transform_3(%arg0: i32, %arg1: i32) -> (i32, i32) {
    %c0_i32 = arith.constant 0 : i32
    %c0_i32_0 = arith.constant 0 : i32
    %c0_i32_1 = arith.constant 0 : i32
    return %c0_i32, %c0_i32_0 : i32, i32
  }
  func.func @transform_4(%arg0: i32, %arg1: i32) -> (i32, i32) {
    %c0_i32 = arith.constant 0 : i32
    %c0_i32_0 = arith.constant 0 : i32
    %c0_i32_1 = arith.constant 0 : i32
    return %c0_i32, %c0_i32_0 : i32, i32
  }
  func.func @transform_5(%arg0: i32, %arg1: i32) -> (i32, i32, i32) {
    %c0_i32 = arith.constant 0 : i32
    %c0_i32_0 = arith.constant 0 : i32
    return %arg0, %c0_i32, %arg1 : i32, i32, i32
  }
}

</mosaic_0001>

<llo_original>
// kernel: tpu_custom_call.1
$region0: #{tpu_custom_call.1}
  #allocation0 [shape = 'u32[]', space=smem, size = 0x4, offset = 0x4, fixed_abs, tag = 'smem constant byte address 0x4 - core index']
  #allocation1 [shape = 'u32[144,128]{1,0:T(1,128)}', space=vmem, size = 0x12000, scoped, tag = 'internal scratch']
  %s0 = inlined_call_operand.hbm [shape: f32[2,64,1024], index: 0, kind: input, shape index: {}]
  %s1 = inlined_call_operand.vmem [shape: f32[64,64], index: 1, kind: input, shape index: {}]
  %s2 = inlined_call_operand.vmem [shape: f32[64,1], index: 2, kind: input, shape index: {}]
  %s3 = inlined_call_operand.vmem [shape: f32[64,64], index: 3, kind: input, shape index: {}]
  %s4 = inlined_call_operand.vmem [shape: f32[64,1], index: 4, kind: input, shape index: {}]
  %s5 = inlined_call_operand.hbm [shape: f32[2,64,1024], index: 5, kind: output, shape index: {}]
  %s6 = sld [smem:[#allocation0]]
  $region57: #{tpu_custom_call.1} parent=0
    _
  %s8 = ssub.s32 1, %s6
  %s9 = scalar_select 0, %s8, %s6
  $region1: #{tpu_custom_call.1} parent=0
    #allocation2 [shape = 'u8[524288]{0}', space=vmem, size = 0x80000, scoped, tag = 'input window, operand 0']
    #allocation3 [shape = 's32[2]{0}', space=sflag, size = 0x8, scoped, tag = 'scoped memory for tpu_custom_call.1']
    #allocation4 [shape = 's32[2]{0}', space=sflag, size = 0x8, scoped, tag = 'scoped memory for tpu_custom_call.1']
    #allocation5 [shape = 'u8[524288]{0}', space=vmem, size = 0x80000, scoped, tag = 'output window, operand 0']
    %10 = vsyncpa [#allocation3], 0
    %s11 = scalar_lea.sflag [#allocation3], 1
    %12 = vsyncpa %s11, 0
    %13 = vsyncpa [#allocation4], 0
    %s14 = scalar_lea.sflag [#allocation4], 1
    %15 = vsyncpa %s14, 0
    loop: start=0, step=1, limit=4
    $region2: #{tpu_custom_call.1} parent=1 // loop_pre_header
      _
    $region3: #{tpu_custom_call.1} parent=1 // loop_header
      %s17 = sphi 0, %s21
      %p18 = scmp.ge.s32.totalorder %s17, 4
      %s24 = sphi 0, %s36
      %s25 = sphi 0, %s32
      %s26 = sphi 0, %s24
      %s27 = sphi 0, %s25
      %s28 = sphi 0, %s26
      %s29 = sphi 0, %s27
      %s41 = sphi 0, %s43
      %s44 = sphi 0, %s41
      %s45 = sphi 0, %s44
      %s61 = sphi 0, %s45
      %s65 = sphi 0, %s65
      %s67 = sphi 0, %s65
      %s68 = sphi 0, %s67
      %s82 = sphi 0, %s68
      %s86 = sphi 0, %s86
      %s88 = sphi 0, %s86
      %s89 = sphi 0, %s88
      %s103 = sphi 0, %s89
      %s107 = sphi 0, %s107
      %s109 = sphi 0, %s107
      %s110 = sphi 0, %s109
      %s124 = sphi 0, %s110
      %s128 = sphi 0, %s128
      %s130 = sphi 0, %s128
      %s131 = sphi 0, %s130
      %s145 = sphi 0, %s131
      %s153 = sphi 0, %s155
      %s156 = sphi 0, %s153
      %s157 = sphi 0, %s156
      %s173 = sphi 0, %s157
    $region4: #{tpu_custom_call.1} parent=1 // loop_header_branch
      %20 = sbr.rel (%p18) target = $region8
    $region5: #{tpu_custom_call.1} parent=1 // loop_body
      %s22 = ssub.s32 %s17, 1
      %s23 = ssub.s32 %s17, 2
      %s30 = sadd.s32 1, %s25
      %p31 = scmp.ge.s32.totalorder %s30, 1
      %s32 = scalar_select %p31, 0, %s30
      %s33 = sadd.s32 1, %s24
      %s34 = scalar_select %p31, %s33, %s24
      %p35 = scmp.ge.s32.totalorder %s34, 2
      %s36 = scalar_select %p35, 0, %s34
      %s37 = ssub.s32 %s24, %s36
      %s38 = ssub.s32 %s25, %s32
      %s39 = sor.u32 %s37, %s38
      %p40 = scmp.eq.s32.totalorder %s39, 0
      %s42 = sadd.s32 %s41, 1
      %s43 = scalar_select %p40, %s41, %s42
      %p46 = pneg %p40
      %p47 = scmp.eq.s32.totalorder %s17, 1
      %p48 = por %p46, %p47
      %p49 = scmp.ne.s32.totalorder %s41, %s44
      %p50 = scmp.eq.s32.totalorder %s17, 0
      %p51 = por %p49, %p50
      %p52 = scmp.ne.s32.totalorder %s41, %s44
      %p53 = scmp.eq.s32.totalorder %s22, 1
      %p54 = por %p52, %p53
      %p55 = scmp.ne.s32.totalorder %s44, %s45
      %p56 = scmp.eq.s32.totalorder %s22, 0
      %p57 = por %p55, %p56
      %p58 = scmp.ne.s32.totalorder %s44, %s45
      %p59 = scmp.eq.s32.totalorder %s23, 1
      %p60 = por %p58, %p59
      %p62 = scmp.ne.s32.totalorder %s45, %s61
      %p63 = scmp.eq.s32.totalorder %s23, 0
      %p64 = por %p62, %p63
      %s66 = sadd.s32 %s65, 1
      %p69 = scmp.eq.s32.totalorder %s17, 1
      %p70 = scmp.ne.s32.totalorder %s65, %s67
      %p71 = scmp.eq.s32.totalorder %s17, 0
      %p72 = por %p70, %p71
      %p73 = scmp.ne.s32.totalorder %s65, %s67
      %p74 = scmp.eq.s32.totalorder %s22, 1
      %p75 = por %p73, %p74
      %p76 = scmp.ne.s32.totalorder %s67, %s68
      %p77 = scmp.eq.s32.totalorder %s22, 0
      %p78 = por %p76, %p77
      %p79 = scmp.ne.s32.totalorder %s67, %s68
      %p80 = scmp.eq.s32.totalorder %s23, 1
      %p81 = por %p79, %p80
      %p83 = scmp.ne.s32.totalorder %s68, %s82
      %p84 = scmp.eq.s32.totalorder %s23, 0
      %p85 = por %p83, %p84
      %s87 = sadd.s32 %s86, 1
      %p90 = scmp.eq.s32.totalorder %s17, 1
      %p91 = scmp.ne.s32.totalorder %s86, %s88
      %p92 = scmp.eq.s32.totalorder %s17, 0
      %p93 = por %p91, %p92
      %p94 = scmp.ne.s32.totalorder %s86, %s88
      %p95 = scmp.eq.s32.totalorder %s22, 1
      %p96 = por %p94, %p95
      %p97 = scmp.ne.s32.totalorder %s88, %s89
      %p98 = scmp.eq.s32.totalorder %s22, 0
      %p99 = por %p97, %p98
      %p100 = scmp.ne.s32.totalorder %s88, %s89
      %p101 = scmp.eq.s32.totalorder %s23, 1
      %p102 = por %p100, %p101
      %p104 = scmp.ne.s32.totalorder %s89, %s103
      %p105 = scmp.eq.s32.totalorder %s23, 0
      %p106 = por %p104, %p105
      %s108 = sadd.s32 %s107, 1
      %p111 = scmp.eq.s32.totalorder %s17, 1
      %p112 = scmp.ne.s32.totalorder %s107, %s109
      %p113 = scmp.eq.s32.totalorder %s17, 0
      %p114 = por %p112, %p113
      %p115 = scmp.ne.s32.totalorder %s107, %s109
      %p116 = scmp.eq.s32.totalorder %s22, 1
      %p117 = por %p115, %p116
      %p118 = scmp.ne.s32.totalorder %s109, %s110
      %p119 = scmp.eq.s32.totalorder %s22, 0
      %p120 = por %p118, %p119
      %p121 = scmp.ne.s32.totalorder %s109, %s110
      %p122 = scmp.eq.s32.totalorder %s23, 1
      %p123 = por %p121, %p122
      %p125 = scmp.ne.s32.totalorder %s110, %s124
      %p126 = scmp.eq.s32.totalorder %s23, 0
      %p127 = por %p125, %p126
      %s129 = sadd.s32 %s128, 1
      %p132 = scmp.eq.s32.totalorder %s17, 1
      %p133 = scmp.ne.s32.totalorder %s128, %s130
      %p134 = scmp.eq.s32.totalorder %s17, 0
      %p135 = por %p133, %p134
      %p136 = scmp.ne.s32.totalorder %s128, %s130
      %p137 = scmp.eq.s32.totalorder %s22, 1
      %p138 = por %p136, %p137
      %p139 = scmp.ne.s32.totalorder %s130, %s131
      %p140 = scmp.eq.s32.totalorder %s22, 0
      %p141 = por %p139, %p140
      %p142 = scmp.ne.s32.totalorder %s130, %s131
      %p143 = scmp.eq.s32.totalorder %s23, 1
      %p144 = por %p142, %p143
      %p146 = scmp.ne.s32.totalorder %s131, %s145
      %p147 = scmp.eq.s32.totalorder %s23, 0
      %p148 = por %p146, %p147
      %s149 = ssub.s32 %s24, %s36
      %s150 = ssub.s32 %s25, %s32
      %s151 = sor.u32 %s149, %s150
      %p152 = scmp.eq.s32.totalorder %s151, 0
      %s154 = sadd.s32 %s153, 1
      %s155 = scalar_select %p152, %s153, %s154
      %p158 = pneg %p152
      %p159 = scmp.eq.s32.totalorder %s17, 1
      %p160 = por %p158, %p159
      %p161 = scmp.ne.s32.totalorder %s153, %s156
      %p162 = scmp.eq.s32.totalorder %s17, 0
      %p163 = por %p161, %p162
      %p164 = scmp.ne.s32.totalorder %s153, %s156
      %p165 = scmp.eq.s32.totalorder %s22, 1
      %p166 = por %p164, %p165
      %p167 = scmp.ne.s32.totalorder %s156, %s157
      %p168 = scmp.eq.s32.totalorder %s22, 0
      %p169 = por %p167, %p168
      %p170 = scmp.ne.s32.totalorder %s156, %s157
      %p171 = scmp.eq.s32.totalorder %s23, 1
      %p172 = por %p170, %p171
      %p174 = scmp.ne.s32.totalorder %s157, %s173
      %p175 = scmp.eq.s32.totalorder %s23, 0
      %p176 = por %p174, %p175
      %p177 = scmp.le.s32.totalorder 1, %s17
      %p178 = scmp.lt.s32.totalorder %s17, 3
      %p179 = pnand %p177, %p178
      %p180 = pneg %p179
      // Predicated region
      $region9: #{tpu_custom_call.1} parent=5 // pred_check
        _
      $region10: #{tpu_custom_call.1} parent=5 // pred_check_branch
        %182 = sbr.rel (%p179) target = $region12
      $region11: #{tpu_custom_call.1} parent=5 // pred_region
        %s183 = ssub.s32 %s17, 1
        // Predicated region
        $region13: #{tpu_custom_call.1} parent=11 // pred_check
          %p184 = pneg %p78
        $region14: #{tpu_custom_call.1} parent=11 // pred_check_branch
          %186 = sbr.rel (%p184) target = $region16
        $region15: #{tpu_custom_call.1} parent=11 // pred_region
          _
        $region16: #{tpu_custom_call.1} parent=11 // pred_fallthru
          _
        // Predicated region
        $region17: #{tpu_custom_call.1} parent=11 // pred_check
          %p187 = pneg %p99
        $region18: #{tpu_custom_call.1} parent=11 // pred_check_branch
          %189 = sbr.rel (%p187) target = $region20
        $region19: #{tpu_custom_call.1} parent=11 // pred_region
          _
        $region20: #{tpu_custom_call.1} parent=11 // pred_fallthru
          _
        // Predicated region
        $region21: #{tpu_custom_call.1} parent=11 // pred_check
          %p190 = pneg %p120
        $region22: #{tpu_custom_call.1} parent=11 // pred_check_branch
          %192 = sbr.rel (%p190) target = $region24
        $region23: #{tpu_custom_call.1} parent=11 // pred_region
          _
        $region24: #{tpu_custom_call.1} parent=11 // pred_fallthru
          _
        // Predicated region
        $region25: #{tpu_custom_call.1} parent=11 // pred_check
          %p193 = pneg %p141
        $region26: #{tpu_custom_call.1} parent=11 // pred_check_branch
          %195 = sbr.rel (%p193) target = $region28
        $region27: #{tpu_custom_call.1} parent=11 // pred_region
          _
        $region28: #{tpu_custom_call.1} parent=11 // pred_fallthru
          _
      $region12: #{tpu_custom_call.1} parent=5 // pred_fallthru
        _
      %p196 = scmp.lt.s32.totalorder %s17, 2
      // Predicated region
      $region29: #{tpu_custom_call.1} parent=5 // pred_check
        %p197 = pneg %p196
      $region30: #{tpu_custom_call.1} parent=5 // pred_check_branch
        %199 = sbr.rel (%p197) target = $region32
      $region31: #{tpu_custom_call.1} parent=5 // pred_region
        // Predicated region
        $region33: #{tpu_custom_call.1} parent=31 // pred_check
          %p200 = pneg %p51
        $region34: #{tpu_custom_call.1} parent=31 // pred_check_branch
          %202 = sbr.rel (%p200) target = $region36
        $region35: #{tpu_custom_call.1} parent=31 // pred_region
          %s203 = sand.u32 %s41, 1
          %s204 = scalar_lea.sflag [#allocation3], %s203
          %s205 = sand.u32 %s41, 1
          %s206 = smul.addr %s205, 512
          %s207 = scalar_lea.vmem [#allocation2], %s206
          %s208 = smul.u32 8, %s25
          %s210 = ssub.s32 8192, 8192
          %211 = vsyncadd %s204, %s210
          %s212 = smul.addr %s24, 64
          %s213 = sadd.s32 %s208, %s212
          %s214 = smul.addr %s213, 128
          %s215 = scalar_lea.hbm %s0, %s214
          %s216 = sshll.u32 %s207, 4
          %s217 = int_to_ptr.vmem [resolvable:$true] %s216
          %222 = dma.hbm_to_vmem [thread:$0]  %s215, 8192, %s217, %s204, 1024, 1024, 64
        $region36: #{tpu_custom_call.1} parent=31 // pred_fallthru
          _
      $region32: #{tpu_custom_call.1} parent=5 // pred_fallthru
        _
      %p223 = scmp.le.s32.totalorder 1, %s17
      %p224 = scmp.lt.s32.totalorder %s17, 3
      %p225 = pnand %p223, %p224
      %p226 = pneg %p225
      // Predicated region
      $region37: #{tpu_custom_call.1} parent=5 // pred_check
        _
      $region38: #{tpu_custom_call.1} parent=5 // pred_check_branch
        %228 = sbr.rel (%p225) target = $region40
      $region39: #{tpu_custom_call.1} parent=5 // pred_region
        %s229 = ssub.s32 %s17, 1
        %s230 = sand.u32 %s44, 1
        %s231 = scalar_lea.sflag [#allocation3], %s230
        %s232 = sand.u32 %s44, 1
        %s233 = smul.addr %s232, 512
        %s234 = scalar_lea.vmem [#allocation2], %s233
        // Predicated region
        $region41: #{tpu_custom_call.1} parent=39 // pred_check
          %p235 = pneg %p57
        $region42: #{tpu_custom_call.1} parent=39 // pred_check_branch
          %237 = sbr.rel (%p235) target = $region44
        $region43: #{tpu_custom_call.1} parent=39 // pred_region
          %238 = dma.done %s231, 8192
        $region44: #{tpu_custom_call.1} parent=39 // pred_fallthru
          _
        %s239 = sand.u32 %s44, 1
        %s240 = scalar_lea.sflag [#allocation3], %s239
        %s241 = sand.u32 %s44, 1
        %s242 = smul.addr %s241, 512
        %s243 = scalar_lea.vmem [#allocation2], %s242
        %p244 = pneg %p57
        %p245 = pneg %p54
        %p246 = pneg %p78
        %p247 = pneg %p75
        %p248 = pneg %p99
        %p249 = pneg %p96
        %p250 = pneg %p120
        %p251 = pneg %p117
        %p252 = pneg %p141
        %p253 = pneg %p138
        %p254 = pneg %p169
        %p255 = pneg %p166
        %s256 = sand.u32 %s156, 1
        %s257 = scalar_lea.sflag [#allocation4], %s256
        %s258 = sand.u32 %s156, 1
        %s259 = smul.addr %s258, 512
        %s260 = scalar_lea.vmem [#allocation5], %s259
        %s261 = smul.u32 8, %s27
        %s262 = smul.u32 8, %s27
        %v263 = vld [vmem:[%s234] sm:$0xff]
        %v264 = vld [vmem:[%s234 + $0x8] sm:$0xff]
        %v265 = vld [vmem:[%s234 + $0x10] sm:$0xff]
        %v266 = vld [vmem:[%s234 + $0x18] sm:$0xff]
        %v267 = vld [vmem:[%s234 + $0x20] sm:$0xff]
        %v268 = vld [vmem:[%s234 + $0x28] sm:$0xff]
        %v269 = vld [vmem:[%s234 + $0x30] sm:$0xff]
        %v270 = vld [vmem:[%s234 + $0x38] sm:$0xff]
        %v271 = vld [vmem:[%s234 + $0x40] sm:$0xff]
        %v272 = vld [vmem:[%s234 + $0x48] sm:$0xff]
        %v273 = vld [vmem:[%s234 + $0x50] sm:$0xff]
        %v274 = vld [vmem:[%s234 + $0x58] sm:$0xff]
        %v275 = vld [vmem:[%s234 + $0x60] sm:$0xff]
        %v276 = vld [vmem:[%s234 + $0x68] sm:$0xff]
        %v277 = vld [vmem:[%s234 + $0x70] sm:$0xff]
        %v278 = vld [vmem:[%s234 + $0x78] sm:$0xff]
        %v279 = vld [vmem:[%s234 + $0x80] sm:$0xff]
        %v280 = vld [vmem:[%s234 + $0x88] sm:$0xff]
        %v281 = vld [vmem:[%s234 + $0x90] sm:$0xff]
        %v282 = vld [vmem:[%s234 + $0x98] sm:$0xff]
        %v283 = vld [vmem:[%s234 + $0xa0] sm:$0xff]
        %v284 = vld [vmem:[%s234 + $0xa8] sm:$0xff]
        %v285 = vld [vmem:[%s234 + $0xb0] sm:$0xff]
        %v286 = vld [vmem:[%s234 + $0xb8] sm:$0xff]
        %v287 = vld [vmem:[%s234 + $0xc0] sm:$0xff]
        %v288 = vld [vmem:[%s234 + $0xc8] sm:$0xff]
        %v289 = vld [vmem:[%s234 + $0xd0] sm:$0xff]
        %v290 = vld [vmem:[%s234 + $0xd8] sm:$0xff]
        %v291 = vld [vmem:[%s234 + $0xe0] sm:$0xff]
        %v292 = vld [vmem:[%s234 + $0xe8] sm:$0xff]
        %v293 = vld [vmem:[%s234 + $0xf0] sm:$0xff]
        %v294 = vld [vmem:[%s234 + $0xf8] sm:$0xff]
        %v295 = vld [vmem:[%s234 + $0x100] sm:$0xff]
        %v296 = vld [vmem:[%s234 + $0x108] sm:$0xff]
        %v297 = vld [vmem:[%s234 + $0x110] sm:$0xff]
        %v298 = vld [vmem:[%s234 + $0x118] sm:$0xff]
        %v299 = vld [vmem:[%s234 + $0x120] sm:$0xff]
        %v300 = vld [vmem:[%s234 + $0x128] sm:$0xff]
        %v301 = vld [vmem:[%s234 + $0x130] sm:$0xff]
        %v302 = vld [vmem:[%s234 + $0x138] sm:$0xff]
        %v303 = vld [vmem:[%s234 + $0x140] sm:$0xff]
        %v304 = vld [vmem:[%s234 + $0x148] sm:$0xff]
        %v305 = vld [vmem:[%s234 + $0x150] sm:$0xff]
        %v306 = vld [vmem:[%s234 + $0x158] sm:$0xff]
        %v307 = vld [vmem:[%s234 + $0x160] sm:$0xff]
        %v308 = vld [vmem:[%s234 + $0x168] sm:$0xff]
        %v309 = vld [vmem:[%s234 + $0x170] sm:$0xff]
        %v310 = vld [vmem:[%s234 + $0x178] sm:$0xff]
        %v311 = vld [vmem:[%s234 + $0x180] sm:$0xff]
        %v312 = vld [vmem:[%s234 + $0x188] sm:$0xff]
        %v313 = vld [vmem:[%s234 + $0x190] sm:$0xff]
        %v314 = vld [vmem:[%s234 + $0x198] sm:$0xff]
        %v315 = vld [vmem:[%s234 + $0x1a0] sm:$0xff]
        %v316 = vld [vmem:[%s234 + $0x1a8] sm:$0xff]
        %v317 = vld [vmem:[%s234 + $0x1b0] sm:$0xff]
        %v318 = vld [vmem:[%s234 + $0x1b8] sm:$0xff]
        %v319 = vld [vmem:[%s234 + $0x1c0] sm:$0xff]
        %v320 = vld [vmem:[%s234 + $0x1c8] sm:$0xff]
        %v321 = vld [vmem:[%s234 + $0x1d0] sm:$0xff]
        %v322 = vld [vmem:[%s234 + $0x1d8] sm:$0xff]
        %v323 = vld [vmem:[%s234 + $0x1e0] sm:$0xff]
        %v324 = vld [vmem:[%s234 + $0x1e8] sm:$0xff]
        %v325 = vld [vmem:[%s234 + $0x1f0] sm:$0xff]
        %v326 = vld [vmem:[%s234 + $0x1f8] sm:$0xff]
        %v327 = vld [vmem:[%s1] sm:$0xff]
        %v328 = vld [vmem:[%s1 + $0x8] sm:$0xff]
        %v329 = vld [vmem:[%s1 + $0x10] sm:$0xff]
        %v330 = vld [vmem:[%s1 + $0x18] sm:$0xff]
        %v331 = vld [vmem:[%s1 + $0x20] sm:$0xff]
        %v332 = vld [vmem:[%s1 + $0x28] sm:$0xff]
        %v333 = vld [vmem:[%s1 + $0x30] sm:$0xff]
        %v334 = vld [vmem:[%s1 + $0x38] sm:$0xff]
        %v335 = vld [vmem:[%s2] sm:$0xff]
        %v336 = vld [vmem:[%s2 + $0x8] sm:$0xff]
        %v337 = vld [vmem:[%s2 + $0x10] sm:$0xff]
        %v338 = vld [vmem:[%s2 + $0x18] sm:$0xff]
        %v339 = vld [vmem:[%s2 + $0x20] sm:$0xff]
        %v340 = vld [vmem:[%s2 + $0x28] sm:$0xff]
        %v341 = vld [vmem:[%s2 + $0x30] sm:$0xff]
        %v342 = vld [vmem:[%s2 + $0x38] sm:$0xff]
        %344 = vset.pattern.permute.xlu0 0
        %345 = vperm.xlu0 %344, %v335
        %v346 = vpop.permute.xlu0 %345
        %349 = vset.pattern.permute.xlu0 0
        %350 = vperm.xlu0 %349, %v336
        %v351 = vpop.permute.xlu0 %350
        %354 = vset.pattern.permute.xlu0 0
        %355 = vperm.xlu0 %354, %v337
        %v356 = vpop.permute.xlu0 %355
        %359 = vset.pattern.permute.xlu0 0
        %360 = vperm.xlu0 %359, %v338
        %v361 = vpop.permute.xlu0 %360
        %364 = vset.pattern.permute.xlu0 0
        %365 = vperm.xlu0 %364, %v339
        %v366 = vpop.permute.xlu0 %365
        %369 = vset.pattern.permute.xlu0 0
        %370 = vperm.xlu0 %369, %v340
        %v371 = vpop.permute.xlu0 %370
        %374 = vset.pattern.permute.xlu0 0
        %375 = vperm.xlu0 %374, %v341
        %v376 = vpop.permute.xlu0 %375
        %379 = vset.pattern.permute.xlu0 0
        %380 = vperm.xlu0 %379, %v342
        %v381 = vpop.permute.xlu0 %380
        %vm383 = vcmask 523264
        %v385 = vsel %vm383, %v327, 0
        %v388 = vsel %vm383, %v328, 0
        %v391 = vsel %vm383, %v329, 0
        %v394 = vsel %vm383, %v330, 0
        %v397 = vsel %vm383, %v331, 0
        %v400 = vsel %vm383, %v332, 0
        %v403 = vsel %vm383, %v333, 0
        %v406 = vsel %vm383, %v334, 0
        %408 = vmatprep.subr.mxu0 %v264
        %409 = vmatpush1.msra.mxu0 %v263
        %410 = vmatprep.subr.mxu0 %v272
        %411 = vmatpush1.msra.mxu0 %v271
        %412 = vmatprep.subr.mxu0 %v280
        %413 = vmatpush1.msra.mxu0 %v279
        %414 = vmatprep.subr.mxu0 %v288
        %415 = vmatpush1.msra.mxu0 %v287
        %416 = vmatprep.subr.mxu0 %v296
        %417 = vmatpush1.msra.mxu0 %v295
        %418 = vmatprep.subr.mxu0 %v304
        %419 = vmatpush1.msra.mxu0 %v303
        %420 = vmatprep.subr.mxu0 %v312
        %421 = vmatpush1.msra.mxu0 %v311
        %422 = vmatprep.subr.mxu0 %v320
        %423 = vmatpush1.msra.mxu0 %v319
        %424 = vmatprep.subr.mxu0 0.0
        %425 = vmatpush1.msra.mxu0 0.0
        %426 = vmatprep.subr.mxu0 0.0
        %427 = vmatpush1.msra.mxu0 0.0
        %428 = vmatprep.subr.mxu0 0.0
        %429 = vmatpush1.msra.mxu0 0.0
        %430 = vmatprep.subr.mxu0 0.0
        %431 = vmatpush1.msra.mxu0 0.0
        %432 = vmatprep.subr.mxu0 0.0
        %433 = vmatpush1.msra.mxu0 0.0
        %434 = vmatprep.subr.mxu0 0.0
        %435 = vmatpush1.msra.mxu0 0.0
        %436 = vmatprep.subr.mxu0 0.0
        %437 = vmatpush1.msra.mxu0 0.0
        %438 = vmatprep.subr.mxu0 0.0
        %439 = vmatpush1.msra.mxu0 0.0
        %440 = vmatprep.subr.mxu0 0.0
        %441 = vmatpush1.msra.mxu0 0.0
        %442 = vmatprep.subr.mxu0 0.0
        %443 = vmatpush1.msra.mxu0 0.0
        %444 = vmatprep.subr.mxu0 0.0
        %445 = vmatpush1.msra.mxu0 0.0
        %446 = vmatprep.subr.mxu0 0.0
        %447 = vmatpush1.msra.mxu0 0.0
        %448 = vmatprep.subr.mxu0 0.0
        %449 = vmatpush1.msra.mxu0 0.0
        %450 = vmatprep.subr.mxu0 0.0
        %451 = vmatpush1.msra.mxu0 0.0
        %452 = vmatprep.subr.mxu0 0.0
        %453 = vmatpush1.msra.mxu0 0.0
        %454 = vmatprep.subr.mxu0 0.0
        %455 = vmatpush1.msra.mxu0 0.0
        %456 = vmatprep.subr.mxu0 0.0
        %457 = vmatpush1.msra.mxu0 0.0
        %458 = vmatprep.subr.mxu0 0.0
        %459 = vmatpush1.msra.mxu0 0.0
        %460 = vmatprep.subr.mxu0 0.0
        %461 = vmatpush1.msra.mxu0 0.0
        %462 = vmatprep.subr.mxu0 0.0
        %463 = vmatpush1.msra.mxu0 0.0
        %464 = vmatprep.subr.mxu0 0.0
        %465 = vmatpush1.msra.mxu0 0.0
        %466 = vmatprep.subr.mxu0 0.0
        %467 = vmatpush1.msra.mxu0 0.0
        %468 = vmatprep.subr.mxu0 0.0
        %469 = vmatpush1.msra.mxu0 0.0
        %470 = vmatprep.subr.mxu0 0.0
        %471 = vmatpush1.msra.mxu0 0.0
        %472 = vmatprep.mubr.f32.mxu0 0.0
        %473 = vmatmul.mubr.f32.gmra.mrb[0].mxu0 %v385
        %v474 = vpop.f32.mrb[0].mxu0
        %v475 = vadd.f32 %v346, %v474
        %v476 = vpop.f32.mrb[0].mxu0
        %v477 = vadd.f32 %v346, %v476
        %478 = vmatprep.mubr.f32.mxu0 0.0
        %479 = vmatmul.mubr.f32.gmra.mrb[0].mxu0 %v388
        %v480 = vpop.f32.mrb[0].mxu0
        %v481 = vadd.f32 %v351, %v480
        %v482 = vpop.f32.mrb[0].mxu0
        %v483 = vadd.f32 %v351, %v482
        %484 = vmatprep.mubr.f32.mxu0 0.0
        %485 = vmatmul.mubr.f32.gmra.mrb[0].mxu0 %v391
        %v486 = vpop.f32.mrb[0].mxu0
        %v487 = vadd.f32 %v356, %v486
        %v488 = vpop.f32.mrb[0].mxu0
        %v489 = vadd.f32 %v356, %v488
        %490 = vmatprep.mubr.f32.mxu0 0.0
        %491 = vmatmul.mubr.f32.gmra.mrb[0].mxu0 %v394
        %v492 = vpop.f32.mrb[0].mxu0
        %v493 = vadd.f32 %v361, %v492
        %v494 = vpop.f32.mrb[0].mxu0
        %v495 = vadd.f32 %v361, %v494
        %496 = vmatprep.mubr.f32.mxu0 0.0
        %497 = vmatmul.mubr.f32.gmra.mrb[0].mxu0 %v397
        %v498 = vpop.f32.mrb[0].mxu0
        %v499 = vadd.f32 %v366, %v498
        %v500 = vpop.f32.mrb[0].mxu0
        %v501 = vadd.f32 %v366, %v500
        %502 = vmatprep.mubr.f32.mxu0 0.0
        %503 = vmatmul.mubr.f32.gmra.mrb[0].mxu0 %v400
        %v504 = vpop.f32.mrb[0].mxu0
        %v505 = vadd.f32 %v371, %v504
        %v506 = vpop.f32.mrb[0].mxu0
        %v507 = vadd.f32 %v371, %v506
        %508 = vmatprep.mubr.f32.mxu0 0.0
        %509 = vmatmul.mubr.f32.gmra.mrb[0].mxu0 %v403
        %v510 = vpop.f32.mrb[0].mxu0
        %v511 = vadd.f32 %v376, %v510
        %v512 = vpop.f32.mrb[0].mxu0
        %v513 = vadd.f32 %v376, %v512
        %514 = vmatprep.mubr.f32.mxu0 0.0
        %515 = vmatmul.mubr.f32.gmra.mrb[0].mxu0 %v406
        %v516 = vpop.f32.mrb[0].mxu0
        %v517 = vadd.f32 %v381, %v516
        %v518 = vpop.f32.mrb[0].mxu0
        %v519 = vadd.f32 %v381, %v518
        %520 = vdwg.mxu0
        %521 = vmatprep.subr.mxu0 %v266
        %522 = vmatpush1.msra.mxu0 %v265
        %523 = vmatprep.subr.mxu0 %v274
        %524 = vmatpush1.msra.mxu0 %v273
        %525 = vmatprep.subr.mxu0 %v282
        %526 = vmatpush1.msra.mxu0 %v281
        %527 = vmatprep.subr.mxu0 %v290
        %528 = vmatpush1.msra.mxu0 %v289
        %529 = vmatprep.subr.mxu0 %v298
        %530 = vmatpush1.msra.mxu0 %v297
        %531 = vmatprep.subr.mxu0 %v306
        %532 = vmatpush1.msra.mxu0 %v305
        %533 = vmatprep.subr.mxu0 %v314
        %534 = vmatpush1.msra.mxu0 %v313
        %535 = vmatprep.subr.mxu0 %v322
        %536 = vmatpush1.msra.mxu0 %v321
        %537 = vmatprep.subr.mxu0 0.0
        %538 = vmatpush1.msra.mxu0 0.0
        %539 = vmatprep.subr.mxu0 0.0
        %540 = vmatpush1.msra.mxu0 0.0
        %541 = vmatprep.subr.mxu0 0.0
        %542 = vmatpush1.msra.mxu0 0.0
        %543 = vmatprep.subr.mxu0 0.0
        %544 = vmatpush1.msra.mxu0 0.0
        %545 = vmatprep.subr.mxu0 0.0
        %546 = vmatpush1.msra.mxu0 0.0
        %547 = vmatprep.subr.mxu0 0.0
        %548 = vmatpush1.msra.mxu0 0.0
        %549 = vmatprep.subr.mxu0 0.0
        %550 = vmatpush1.msra.mxu0 0.0
        %551 = vmatprep.subr.mxu0 0.0
        %552 = vmatpush1.msra.mxu0 0.0
        %553 = vmatprep.subr.mxu0 0.0
        %554 = vmatpush1.msra.mxu0 0.0
        %555 = vmatprep.subr.mxu0 0.0
        %556 = vmatpush1.msra.mxu0 0.0
        %557 = vmatprep.subr.mxu0 0.0
        %558 = vmatpush1.msra.mxu0 0.0
        %559 = vmatprep.subr.mxu0 0.0
        %560 = vmatpush1.msra.mxu0 0.0
        %561 = vmatprep.subr.mxu0 0.0
        %562 = vmatpush1.msra.mxu0 0.0
        %563 = vmatprep.subr.mxu0 0.0
        %564 = vmatpush1.msra.mxu0 0.0
        %565 = vmatprep.subr.mxu0 0.0
        %566 = vmatpush1.msra.mxu0 0.0
        %567 = vmatprep.subr.mxu0 0.0
        %568 = vmatpush1.msra.mxu0 0.0
        %569 = vmatprep.subr.mxu0 0.0
        %570 = vmatpush1.msra.mxu0 0.0
        %571 = vmatprep.subr.mxu0 0.0
        %572 = vmatpush1.msra.mxu0 0.0
        %573 = vmatprep.subr.mxu0 0.0
        %574 = vmatpush1.msra.mxu0 0.0
        %575 = vmatprep.subr.mxu0 0.0
        %576 = vmatpush1.msra.mxu0 0.0
        %577 = vmatprep.subr.mxu0 0.0
        %578 = vmatpush1.msra.mxu0 0.0
        %579 = vmatprep.subr.mxu0 0.0
        %580 = vmatpush1.msra.mxu0 0.0
        %581 = vmatprep.subr.mxu0 0.0
        %582 = vmatpush1.msra.mxu0 0.0
        %583 = vmatprep.subr.mxu0 0.0
        %584 = vmatpush1.msra.mxu0 0.0
        %585 = vmatprep.mubr.f32.mxu0 0.0
        %586 = vmatmul.mubr.f32.gmra.mrb[0].mxu0 %v385
        %v587 = vpop.f32.mrb[0].mxu0
        %v588 = vadd.f32 %v346, %v587
        %v589 = vpop.f32.mrb[0].mxu0
        %v590 = vadd.f32 %v346, %v589
        %591 = vmatprep.mubr.f32.mxu0 0.0
        %592 = vmatmul.mubr.f32.gmra.mrb[0].mxu0 %v388
        %v593 = vpop.f32.mrb[0].mxu0
        %v594 = vadd.f32 %v351, %v593
        %v595 = vpop.f32.mrb[0].mxu0
        %v596 = vadd.f32 %v351, %v595
        %597 = vmatprep.mubr.f32.mxu0 0.0
        %598 = vmatmul.mubr.f32.gmra.mrb[0].mxu0 %v391
        %v599 = vpop.f32.mrb[0].mxu0
        %v600 = vadd.f32 %v356, %v599
        %v601 = vpop.f32.mrb[0].mxu0
        %v602 = vadd.f32 %v356, %v601
        %603 = vmatprep.mubr.f32.mxu0 0.0
        %604 = vmatmul.mubr.f32.gmra.mrb[0].mxu0 %v394
        %v605 = vpop.f32.mrb[0].mxu0
        %v606 = vadd.f32 %v361, %v605
        %v607 = vpop.f32.mrb[0].mxu0
        %v608 = vadd.f32 %v361, %v607
        %609 = vmatprep.mubr.f32.mxu0 0.0
        %610 = vmatmul.mubr.f32.gmra.mrb[0].mxu0 %v397
        %v611 = vpop.f32.mrb[0].mxu0
        %v612 = vadd.f32 %v366, %v611
        %v613 = vpop.f32.mrb[0].mxu0
        %v614 = vadd.f32 %v366, %v613
        %615 = vmatprep.mubr.f32.mxu0 0.0
        %616 = vmatmul.mubr.f32.gmra.mrb[0].mxu0 %v400
        %v617 = vpop.f32.mrb[0].mxu0
        %v618 = vadd.f32 %v371, %v617
        %v619 = vpop.f32.mrb[0].mxu0
        %v620 = vadd.f32 %v371, %v619
        %621 = vmatprep.mubr.f32.mxu0 0.0
        %622 = vmatmul.mubr.f32.gmra.mrb[0].mxu0 %v403
        %v623 = vpop.f32.mrb[0].mxu0
        %v624 = vadd.f32 %v376, %v623
        %v625 = vpop.f32.mrb[0].mxu0
        %v626 = vadd.f32 %v376, %v625
        %627 = vmatprep.mubr.f32.mxu0 0.0
        %628 = vmatmul.mubr.f32.gmra.mrb[0].mxu0 %v406
        %v629 = vpop.f32.mrb[0].mxu0
        %v630 = vadd.f32 %v381, %v629
        %v631 = vpop.f32.mrb[0].mxu0
        %v632 = vadd.f32 %v381, %v631
        %633 = vdwg.mxu0
        %634 = vmatprep.subr.mxu0 %v268
        %635 = vmatpush1.msra.mxu0 %v267
        %636 = vmatprep.subr.mxu0 %v276
        %637 = vmatpush1.msra.mxu0 %v275
        %638 = vmatprep.subr.mxu0 %v284
        %639 = vmatpush1.msra.mxu0 %v283
        %640 = vmatprep.subr.mxu0 %v292
        %641 = vmatpush1.msra.mxu0 %v291
        %642 = vmatprep.subr.mxu0 %v300
        %643 = vmatpush1.msra.mxu0 %v299
        %644 = vmatprep.subr.mxu0 %v308
        %645 = vmatpush1.msra.mxu0 %v307
        %646 = vmatprep.subr.mxu0 %v316
        %647 = vmatpush1.msra.mxu0 %v315
        %648 = vmatprep.subr.mxu0 %v324
        %649 = vmatpush1.msra.mxu0 %v323
        %650 = vmatprep.subr.mxu0 0.0
        %651 = vmatpush1.msra.mxu0 0.0
        %652 = vmatprep.subr.mxu0 0.0
        %653 = vmatpush1.msra.mxu0 0.0
        %654 = vmatprep.subr.mxu0 0.0
        %655 = vmatpush1.msra.mxu0 0.0
        %656 = vmatprep.subr.mxu0 0.0
        %657 = vmatpush1.msra.mxu0 0.0
        %658 = vmatprep.subr.mxu0 0.0
        %659 = vmatpush1.msra.mxu0 0.0
        %660 = vmatprep.subr.mxu0 0.0
        %661 = vmatpush1.msra.mxu0 0.0
        %662 = vmatprep.subr.mxu0 0.0
        %663 = vmatpush1.msra.mxu0 0.0
        %664 = vmatprep.subr.mxu0 0.0
        %665 = vmatpush1.msra.mxu0 0.0
        %666 = vmatprep.subr.mxu0 0.0
        %667 = vmatpush1.msra.mxu0 0.0
        %668 = vmatprep.subr.mxu0 0.0
        %669 = vmatpush1.msra.mxu0 0.0
        %670 = vmatprep.subr.mxu0 0.0
        %671 = vmatpush1.msra.mxu0 0.0
        %672 = vmatprep.subr.mxu0 0.0
        %673 = vmatpush1.msra.mxu0 0.0
        %674 = vmatprep.subr.mxu0 0.0
        %675 = vmatpush1.msra.mxu0 0.0
        %676 = vmatprep.subr.mxu0 0.0
        %677 = vmatpush1.msra.mxu0 0.0
        %678 = vmatprep.subr.mxu0 0.0
        %679 = vmatpush1.msra.mxu0 0.0
        %680 = vmatprep.subr.mxu0 0.0
        %681 = vmatpush1.msra.mxu0 0.0
        %682 = vmatprep.subr.mxu0 0.0
        %683 = vmatpush1.msra.mxu0 0.0
        %684 = vmatprep.subr.mxu0 0.0
        %685 = vmatpush1.msra.mxu0 0.0
        %686 = vmatprep.subr.mxu0 0.0
        %687 = vmatpush1.msra.mxu0 0.0
        %688 = vmatprep.subr.mxu0 0.0
        %689 = vmatpush1.msra.mxu0 0.0
        %690 = vmatprep.subr.mxu0 0.0
        %691 = vmatpush1.msra.mxu0 0.0
        %692 = vmatprep.subr.mxu0 0.0
        %693 = vmatpush1.msra.mxu0 0.0
        %694 = vmatprep.subr.mxu0 0.0
        %695 = vmatpush1.msra.mxu0 0.0
        %696 = vmatprep.subr.mxu0 0.0
        %697 = vmatpush1.msra.mxu0 0.0
        %698 = vmatprep.mubr.f32.mxu0 0.0
        %699 = vmatmul.mubr.f32.gmra.mrb[0].mxu0 %v385
        %v700 = vpop.f32.mrb[0].mxu0
        %v701 = vadd.f32 %v346, %v700
        %v702 = vpop.f32.mrb[0].mxu0
        %v703 = vadd.f32 %v346, %v702
        %704 = vmatprep.mubr.f32.mxu0 0.0
        %705 = vmatmul.mubr.f32.gmra.mrb[0].mxu0 %v388
        %v706 = vpop.f32.mrb[0].mxu0
        %v707 = vadd.f32 %v351, %v706
        %v708 = vpop.f32.mrb[0].mxu0
        %v709 = vadd.f32 %v351, %v708
        %710 = vmatprep.mubr.f32.mxu0 0.0
        %711 = vmatmul.mubr.f32.gmra.mrb[0].mxu0 %v391
        %v712 = vpop.f32.mrb[0].mxu0
        %v713 = vadd.f32 %v356, %v712
        %v714 = vpop.f32.mrb[0].mxu0
        %v715 = vadd.f32 %v356, %v714
        %716 = vmatprep.mubr.f32.mxu0 0.0
        %717 = vmatmul.mubr.f32.gmra.mrb[0].mxu0 %v394
        %v718 = vpop.f32.mrb[0].mxu0
        %v719 = vadd.f32 %v361, %v718
        %v720 = vpop.f32.mrb[0].mxu0
        %v721 = vadd.f32 %v361, %v720
        %722 = vmatprep.mubr.f32.mxu0 0.0
        %723 = vmatmul.mubr.f32.gmra.mrb[0].mxu0 %v397
        %v724 = vpop.f32.mrb[0].mxu0
        %v725 = vadd.f32 %v366, %v724
        %v726 = vpop.f32.mrb[0].mxu0
        %v727 = vadd.f32 %v366, %v726
        %728 = vmatprep.mubr.f32.mxu0 0.0
        %729 = vmatmul.mubr.f32.gmra.mrb[0].mxu0 %v400
        %v730 = vpop.f32.mrb[0].mxu0
        %v731 = vadd.f32 %v371, %v730
        %v732 = vpop.f32.mrb[0].mxu0
        %v733 = vadd.f32 %v371, %v732
        %734 = vmatprep.mubr.f32.mxu0 0.0
        %735 = vmatmul.mubr.f32.gmra.mrb[0].mxu0 %v403
        %v736 = vpop.f32.mrb[0].mxu0
        %v737 = vadd.f32 %v376, %v736
        %v738 = vpop.f32.mrb[0].mxu0
        %v739 = vadd.f32 %v376, %v738
        %740 = vmatprep.mubr.f32.mxu0 0.0
        %741 = vmatmul.mubr.f32.gmra.mrb[0].mxu0 %v406
        %v742 = vpop.f32.mrb[0].mxu0
        %v743 = vadd.f32 %v381, %v742
        %v744 = vpop.f32.mrb[0].mxu0
        %v745 = vadd.f32 %v381, %v744
        %746 = vdwg.mxu0
        %747 = vmatprep.subr.mxu0 %v270
        %748 = vmatpush1.msra.mxu0 %v269
        %749 = vmatprep.subr.mxu0 %v278
        %750 = vmatpush1.msra.mxu0 %v277
        %751 = vmatprep.subr.mxu0 %v286
        %752 = vmatpush1.msra.mxu0 %v285
        %753 = vmatprep.subr.mxu0 %v294
        %754 = vmatpush1.msra.mxu0 %v293
        %755 = vmatprep.subr.mxu0 %v302
        %756 = vmatpush1.msra.mxu0 %v301
        %757 = vmatprep.subr.mxu0 %v310
        %758 = vmatpush1.msra.mxu0 %v309
        %759 = vmatprep.subr.mxu0 %v318
        %760 = vmatpush1.msra.mxu0 %v317
        %761 = vmatprep.subr.mxu0 %v326
        %762 = vmatpush1.msra.mxu0 %v325
        %763 = vmatprep.subr.mxu0 0.0
        %764 = vmatpush1.msra.mxu0 0.0
        %765 = vmatprep.subr.mxu0 0.0
        %766 = vmatpush1.msra.mxu0 0.0
        %767 = vmatprep.subr.mxu0 0.0
        %768 = vmatpush1.msra.mxu0 0.0
        %769 = vmatprep.subr.mxu0 0.0
        %770 = vmatpush1.msra.mxu0 0.0
        %771 = vmatprep.subr.mxu0 0.0
        %772 = vmatpush1.msra.mxu0 0.0
        %773 = vmatprep.subr.mxu0 0.0
        %774 = vmatpush1.msra.mxu0 0.0
        %775 = vmatprep.subr.mxu0 0.0
        %776 = vmatpush1.msra.mxu0 0.0
        %777 = vmatprep.subr.mxu0 0.0
        %778 = vmatpush1.msra.mxu0 0.0
        %779 = vmatprep.subr.mxu0 0.0
        %780 = vmatpush1.msra.mxu0 0.0
        %781 = vmatprep.subr.mxu0 0.0
        %782 = vmatpush1.msra.mxu0 0.0
        %783 = vmatprep.subr.mxu0 0.0
        %784 = vmatpush1.msra.mxu0 0.0
        %785 = vmatprep.subr.mxu0 0.0
        %786 = vmatpush1.msra.mxu0 0.0
        %787 = vmatprep.subr.mxu0 0.0
        %788 = vmatpush1.msra.mxu0 0.0
        %789 = vmatprep.subr.mxu0 0.0
        %790 = vmatpush1.msra.mxu0 0.0
        %791 = vmatprep.subr.mxu0 0.0
        %792 = vmatpush1.msra.mxu0 0.0
        %793 = vmatprep.subr.mxu0 0.0
        %794 = vmatpush1.msra.mxu0 0.0
        %795 = vmatprep.subr.mxu0 0.0
        %796 = vmatpush1.msra.mxu0 0.0
        %797 = vmatprep.subr.mxu0 0.0
        %798 = vmatpush1.msra.mxu0 0.0
        %799 = vmatprep.subr.mxu0 0.0
        %800 = vmatpush1.msra.mxu0 0.0
        %801 = vmatprep.subr.mxu0 0.0
        %802 = vmatpush1.msra.mxu0 0.0
        %803 = vmatprep.subr.mxu0 0.0
        %804 = vmatpush1.msra.mxu0 0.0
        %805 = vmatprep.subr.mxu0 0.0
        %806 = vmatpush1.msra.mxu0 0.0
        %807 = vmatprep.subr.mxu0 0.0
        %808 = vmatpush1.msra.mxu0 0.0
        %809 = vmatprep.subr.mxu0 0.0
        %810 = vmatpush1.msra.mxu0 0.0
        %811 = vmatprep.mubr.f32.mxu0 0.0
        %812 = vmatmul.mubr.f32.gmra.mrb[0].mxu0 %v385
        %v813 = vpop.f32.mrb[0].mxu0
        %v814 = vadd.f32 %v346, %v813
        %v815 = vpop.f32.mrb[0].mxu0
        %v816 = vadd.f32 %v346, %v815
        %817 = vmatprep.mubr.f32.mxu0 0.0
        %818 = vmatmul.mubr.f32.gmra.mrb[0].mxu0 %v388
        %v819 = vpop.f32.mrb[0].mxu0
        %v820 = vadd.f32 %v351, %v819
        %v821 = vpop.f32.mrb[0].mxu0
        %v822 = vadd.f32 %v351, %v821
        %823 = vmatprep.mubr.f32.mxu0 0.0
        %824 = vmatmul.mubr.f32.gmra.mrb[0].mxu0 %v391
        %v825 = vpop.f32.mrb[0].mxu0
        %v826 = vadd.f32 %v356, %v825
        %v827 = vpop.f32.mrb[0].mxu0
        %v828 = vadd.f32 %v356, %v827
        %829 = vmatprep.mubr.f32.mxu0 0.0
        %830 = vmatmul.mubr.f32.gmra.mrb[0].mxu0 %v394
        %v831 = vpop.f32.mrb[0].mxu0
        %v832 = vadd.f32 %v361, %v831
        %v833 = vpop.f32.mrb[0].mxu0
        %v834 = vadd.f32 %v361, %v833
        %835 = vmatprep.mubr.f32.mxu0 0.0
        %836 = vmatmul.mubr.f32.gmra.mrb[0].mxu0 %v397
        %v837 = vpop.f32.mrb[0].mxu0
        %v838 = vadd.f32 %v366, %v837
        %v839 = vpop.f32.mrb[0].mxu0
        %v840 = vadd.f32 %v366, %v839
        %841 = vmatprep.mubr.f32.mxu0 0.0
        %842 = vmatmul.mubr.f32.gmra.mrb[0].mxu0 %v400
        %v843 = vpop.f32.mrb[0].mxu0
        %v844 = vadd.f32 %v371, %v843
        %v845 = vpop.f32.mrb[0].mxu0
        %v846 = vadd.f32 %v371, %v845
        %847 = vmatprep.mubr.f32.mxu0 0.0
        %848 = vmatmul.mubr.f32.gmra.mrb[0].mxu0 %v403
        %v849 = vpop.f32.mrb[0].mxu0
        %v850 = vadd.f32 %v376, %v849
        %v851 = vpop.f32.mrb[0].mxu0
        %v852 = vadd.f32 %v376, %v851
        %853 = vmatprep.mubr.f32.mxu0 0.0
        %854 = vmatmul.mubr.f32.gmra.mrb[0].mxu0 %v406
        %v855 = vpop.f32.mrb[0].mxu0
        %v856 = vadd.f32 %v381, %v855
        %v857 = vpop.f32.mrb[0].mxu0
        %v858 = vadd.f32 %v381, %v857
        %859 = vdwg.mxu0
        %v860 = vmax.f32 %v475, 0.0
        %v861 = vmax.f32 %v477, 0.0
        %v862 = vmax.f32 %v588, 0.0
        %v863 = vmax.f32 %v590, 0.0
        %v864 = vmax.f32 %v701, 0.0
        %v865 = vmax.f32 %v703, 0.0
        %v866 = vmax.f32 %v814, 0.0
        %v867 = vmax.f32 %v816, 0.0
        %v868 = vmax.f32 %v481, 0.0
        %v869 = vmax.f32 %v483, 0.0
        %v870 = vmax.f32 %v594, 0.0
        %v871 = vmax.f32 %v596, 0.0
        %v872 = vmax.f32 %v707, 0.0
        %v873 = vmax.f32 %v709, 0.0
        %v874 = vmax.f32 %v820, 0.0
        %v875 = vmax.f32 %v822, 0.0
        %v876 = vmax.f32 %v487, 0.0
        %v877 = vmax.f32 %v489, 0.0
        %v878 = vmax.f32 %v600, 0.0
        %v879 = vmax.f32 %v602, 0.0
        %v880 = vmax.f32 %v713, 0.0
        %v881 = vmax.f32 %v715, 0.0
        %v882 = vmax.f32 %v826, 0.0
        %v883 = vmax.f32 %v828, 0.0
        %v884 = vmax.f32 %v493, 0.0
        %v885 = vmax.f32 %v495, 0.0
        %v886 = vmax.f32 %v606, 0.0
        %v887 = vmax.f32 %v608, 0.0
        %v888 = vmax.f32 %v719, 0.0
        %v889 = vmax.f32 %v721, 0.0
        %v890 = vmax.f32 %v832, 0.0
        %v891 = vmax.f32 %v834, 0.0
        %v892 = vmax.f32 %v499, 0.0
        %v893 = vmax.f32 %v501, 0.0
        %v894 = vmax.f32 %v612, 0.0
        %v895 = vmax.f32 %v614, 0.0
        %v896 = vmax.f32 %v725, 0.0
        %v897 = vmax.f32 %v727, 0.0
        %v898 = vmax.f32 %v838, 0.0
        %v899 = vmax.f32 %v840, 0.0
        %v900 = vmax.f32 %v505, 0.0
        %v901 = vmax.f32 %v507, 0.0
        %v902 = vmax.f32 %v618, 0.0
        %v903 = vmax.f32 %v620, 0.0
        %v904 = vmax.f32 %v731, 0.0
        %v905 = vmax.f32 %v733, 0.0
        %v906 = vmax.f32 %v844, 0.0
        %v907 = vmax.f32 %v846, 0.0
        %v908 = vmax.f32 %v511, 0.0
        %v909 = vmax.f32 %v513, 0.0
        %v910 = vmax.f32 %v624, 0.0
        %v911 = vmax.f32 %v626, 0.0
        %v912 = vmax.f32 %v737, 0.0
        %v913 = vmax.f32 %v739, 0.0
        %v914 = vmax.f32 %v850, 0.0
        %v915 = vmax.f32 %v852, 0.0
        %v916 = vmax.f32 %v517, 0.0
        %v917 = vmax.f32 %v519, 0.0
        %v918 = vmax.f32 %v630, 0.0
        %v919 = vmax.f32 %v632, 0.0
        %v920 = vmax.f32 %v743, 0.0
        %v921 = vmax.f32 %v745, 0.0
        %v922 = vmax.f32 %v856, 0.0
        %v923 = vmax.f32 %v858, 0.0
        %v924 = vld [vmem:[%s3] sm:$0xff]
        %v925 = vld [vmem:[%s3 + $0x8] sm:$0xff]
        %v926 = vld [vmem:[%s3 + $0x10] sm:$0xff]
        %v927 = vld [vmem:[%s3 + $0x18] sm:$0xff]
        %v928 = vld [vmem:[%s3 + $0x20] sm:$0xff]
        %v929 = vld [vmem:[%s3 + $0x28] sm:$0xff]
        %v930 = vld [vmem:[%s3 + $0x30] sm:$0xff]
        %v931 = vld [vmem:[%s3 + $0x38] sm:$0xff]
        %v932 = vld [vmem:[%s4] sm:$0xff]
        %v933 = vld [vmem:[%s4 + $0x8] sm:$0xff]
        %v934 = vld [vmem:[%s4 + $0x10] sm:$0xff]
        %v935 = vld [vmem:[%s4 + $0x18] sm:$0xff]
        %v936 = vld [vmem:[%s4 + $0x20] sm:$0xff]
        %v937 = vld [vmem:[%s4 + $0x28] sm:$0xff]
        %v938 = vld [vmem:[%s4 + $0x30] sm:$0xff]
        %v939 = vld [vmem:[%s4 + $0x38] sm:$0xff]
        %941 = vset.pattern.permute.xlu0 0
        %942 = vperm.xlu0 %941, %v932
        %v943 = vpop.permute.xlu0 %942
        %946 = vset.pattern.permute.xlu0 0
        %947 = vperm.xlu0 %946, %v933
        %v948 = vpop.permute.xlu0 %947
        %951 = vset.pattern.permute.xlu0 0
        %952 = vperm.xlu0 %951, %v934
        %v953 = vpop.permute.xlu0 %952
        %956 = vset.pattern.permute.xlu0 0
        %957 = vperm.xlu0 %956, %v935
        %v958 = vpop.permute.xlu0 %957
        %961 = vset.pattern.permute.xlu0 0
        %962 = vperm.xlu0 %961, %v936
        %v963 = vpop.permute.xlu0 %962
        %966 = vset.pattern.permute.xlu0 0
        %967 = vperm.xlu0 %966, %v937
        %v968 = vpop.permute.xlu0 %967
        %971 = vset.pattern.permute.xlu0 0
        %972 = vperm.xlu0 %971, %v938
        %v973 = vpop.permute.xlu0 %972
        %976 = vset.pattern.permute.xlu0 0
        %977 = vperm.xlu0 %976, %v939
        %v978 = vpop.permute.xlu0 %977
        %v981 = vsel %vm383, %v924, 0
        %v984 = vsel %vm383, %v925, 0
        %v987 = vsel %vm383, %v926, 0
        %v990 = vsel %vm383, %v927, 0
        %v993 = vsel %vm383, %v928, 0
        %v996 = vsel %vm383, %v929, 0
        %v999 = vsel %vm383, %v930, 0
        %v1002 = vsel %vm383, %v931, 0
        %1004 = vmatprep.subr.mxu0 %v861
        %1005 = vmatpush1.msra.mxu0 %v860
        %1006 = vmatprep.subr.mxu0 %v869
        %1007 = vmatpush1.msra.mxu0 %v868
        %1008 = vmatprep.subr.mxu0 %v877
        %1009 = vmatpush1.msra.mxu0 %v876
        %1010 = vmatprep.subr.mxu0 %v885
        %1011 = vmatpush1.msra.mxu0 %v884
        %1012 = vmatprep.subr.mxu0 %v893
        %1013 = vmatpush1.msra.mxu0 %v892
        %1014 = vmatprep.subr.mxu0 %v901
        %1015 = vmatpush1.msra.mxu0 %v900
        %1016 = vmatprep.subr.mxu0 %v909
        %1017 = vmatpush1.msra.mxu0 %v908
        %1018 = vmatprep.subr.mxu0 %v917
        %1019 = vmatpush1.msra.mxu0 %v916
        %1020 = vmatprep.subr.mxu0 0.0
        %1021 = vmatpush1.msra.mxu0 0.0
        %1022 = vmatprep.subr.mxu0 0.0
        %1023 = vmatpush1.msra.mxu0 0.0
        %1024 = vmatprep.subr.mxu0 0.0
        %1025 = vmatpush1.msra.mxu0 0.0
        %1026 = vmatprep.subr.mxu0 0.0
        %1027 = vmatpush1.msra.mxu0 0.0
        %1028 = vmatprep.subr.mxu0 0.0
        %1029 = vmatpush1.msra.mxu0 0.0
        %1030 = vmatprep.subr.mxu0 0.0
        %1031 = vmatpush1.msra.mxu0 0.0
        %1032 = vmatprep.subr.mxu0 0.0
        %1033 = vmatpush1.msra.mxu0 0.0
        %1034 = vmatprep.subr.mxu0 0.0
        %1035 = vmatpush1.msra.mxu0 0.0
        %1036 = vmatprep.subr.mxu0 0.0
        %1037 = vmatpush1.msra.mxu0 0.0
        %1038 = vmatprep.subr.mxu0 0.0
        %1039 = vmatpush1.msra.mxu0 0.0
        %1040 = vmatprep.subr.mxu0 0.0
        %1041 = vmatpush1.msra.mxu0 0.0
        %1042 = vmatprep.subr.mxu0 0.0
        %1043 = vmatpush1.msra.mxu0 0.0
        %1044 = vmatprep.subr.mxu0 0.0
        %1045 = vmatpush1.msra.mxu0 0.0
        %1046 = vmatprep.subr.mxu0 0.0
        %1047 = vmatpush1.msra.mxu0 0.0
        %1048 = vmatprep.subr.mxu0 0.0
        %1049 = vmatpush1.msra.mxu0 0.0
        %1050 = vmatprep.subr.mxu0 0.0
        %1051 = vmatpush1.msra.mxu0 0.0
        %1052 = vmatprep.subr.mxu0 0.0
        %1053 = vmatpush1.msra.mxu0 0.0
        %1054 = vmatprep.subr.mxu0 0.0
        %1055 = vmatpush1.msra.mxu0 0.0
        %1056 = vmatprep.subr.mxu0 0.0
        %1057 = vmatpush1.msra.mxu0 0.0
        %1058 = vmatprep.subr.mxu0 0.0
        %1059 = vmatpush1.msra.mxu0 0.0
        %1060 = vmatprep.subr.mxu0 0.0
        %1061 = vmatpush1.msra.mxu0 0.0
        %1062 = vmatprep.subr.mxu0 0.0
        %1063 = vmatpush1.msra.mxu0 0.0
        %1064 = vmatprep.subr.mxu0 0.0
        %1065 = vmatpush1.msra.mxu0 0.0
        %1066 = vmatprep.subr.mxu0 0.0
        %1067 = vmatpush1.msra.mxu0 0.0
        %1068 = vmatprep.mubr.f32.mxu0 0.0
        %1069 = vmatmul.mubr.f32.gmra.mrb[0].mxu0 %v981
        %v1070 = vpop.f32.mrb[0].mxu0
        %v1071 = vadd.f32 %v943, %v1070
        %v1072 = vpop.f32.mrb[0].mxu0
        %v1073 = vadd.f32 %v943, %v1072
        %1074 = vmatprep.mubr.f32.mxu0 0.0
        %1075 = vmatmul.mubr.f32.gmra.mrb[0].mxu0 %v984
        %v1076 = vpop.f32.mrb[0].mxu0
        %v1077 = vadd.f32 %v948, %v1076
        %v1078 = vpop.f32.mrb[0].mxu0
        %v1079 = vadd.f32 %v948, %v1078
        %1080 = vmatprep.mubr.f32.mxu0 0.0
        %1081 = vmatmul.mubr.f32.gmra.mrb[0].mxu0 %v987
        %v1082 = vpop.f32.mrb[0].mxu0
        %v1083 = vadd.f32 %v953, %v1082
        %v1084 = vpop.f32.mrb[0].mxu0
        %v1085 = vadd.f32 %v953, %v1084
        %1086 = vmatprep.mubr.f32.mxu0 0.0
        %1087 = vmatmul.mubr.f32.gmra.mrb[0].mxu0 %v990
        %v1088 = vpop.f32.mrb[0].mxu0
        %v1089 = vadd.f32 %v958, %v1088
        %v1090 = vpop.f32.mrb[0].mxu0
        %v1091 = vadd.f32 %v958, %v1090
        %1092 = vmatprep.mubr.f32.mxu0 0.0
        %1093 = vmatmul.mubr.f32.gmra.mrb[0].mxu0 %v993
        %v1094 = vpop.f32.mrb[0].mxu0
        %v1095 = vadd.f32 %v963, %v1094
        %v1096 = vpop.f32.mrb[0].mxu0
        %v1097 = vadd.f32 %v963, %v1096
        %1098 = vmatprep.mubr.f32.mxu0 0.0
        %1099 = vmatmul.mubr.f32.gmra.mrb[0].mxu0 %v996
        %v1100 = vpop.f32.mrb[0].mxu0
        %v1101 = vadd.f32 %v968, %v1100
        %v1102 = vpop.f32.mrb[0].mxu0
        %v1103 = vadd.f32 %v968, %v1102
        %1104 = vmatprep.mubr.f32.mxu0 0.0
        %1105 = vmatmul.mubr.f32.gmra.mrb[0].mxu0 %v999
        %v1106 = vpop.f32.mrb[0].mxu0
        %v1107 = vadd.f32 %v973, %v1106
        %v1108 = vpop.f32.mrb[0].mxu0
        %v1109 = vadd.f32 %v973, %v1108
        %1110 = vmatprep.mubr.f32.mxu0 0.0
        %1111 = vmatmul.mubr.f32.gmra.mrb[0].mxu0 %v1002
        %v1112 = vpop.f32.mrb[0].mxu0
        %v1113 = vadd.f32 %v978, %v1112
        %v1114 = vpop.f32.mrb[0].mxu0
        %v1115 = vadd.f32 %v978, %v1114
        %1116 = vdwg.mxu0
        %1117 = vmatprep.subr.mxu0 %v863
        %1118 = vmatpush1.msra.mxu0 %v862
        %1119 = vmatprep.subr.mxu0 %v871
        %1120 = vmatpush1.msra.mxu0 %v870
        %1121 = vmatprep.subr.mxu0 %v879
        %1122 = vmatpush1.msra.mxu0 %v878
        %1123 = vmatprep.subr.mxu0 %v887
        %1124 = vmatpush1.msra.mxu0 %v886
        %1125 = vmatprep.subr.mxu0 %v895
        %1126 = vmatpush1.msra.mxu0 %v894
        %1127 = vmatprep.subr.mxu0 %v903
        %1128 = vmatpush1.msra.mxu0 %v902
        %1129 = vmatprep.subr.mxu0 %v911
        %1130 = vmatpush1.msra.mxu0 %v910
        %1131 = vmatprep.subr.mxu0 %v919
        %1132 = vmatpush1.msra.mxu0 %v918
        %1133 = vmatprep.subr.mxu0 0.0
        %1134 = vmatpush1.msra.mxu0 0.0
        %1135 = vmatprep.subr.mxu0 0.0
        %1136 = vmatpush1.msra.mxu0 0.0
        %1137 = vmatprep.subr.mxu0 0.0
        %1138 = vmatpush1.msra.mxu0 0.0
        %1139 = vmatprep.subr.mxu0 0.0
        %1140 = vmatpush1.msra.mxu0 0.0
        %1141 = vmatprep.subr.mxu0 0.0
        %1142 = vmatpush1.msra.mxu0 0.0
        %1143 = vmatprep.subr.mxu0 0.0
        %1144 = vmatpush1.msra.mxu0 0.0
        %1145 = vmatprep.subr.mxu0 0.0
        %1146 = vmatpush1.msra.mxu0 0.0
        %1147 = vmatprep.subr.mxu0 0.0
        %1148 = vmatpush1.msra.mxu0 0.0
        %1149 = vmatprep.subr.mxu0 0.0
        %1150 = vmatpush1.msra.mxu0 0.0
        %1151 = vmatprep.subr.mxu0 0.0
        %1152 = vmatpush1.msra.mxu0 0.0
        %1153 = vmatprep.subr.mxu0 0.0
        %1154 = vmatpush1.msra.mxu0 0.0
        %1155 = vmatprep.subr.mxu0 0.0
        %1156 = vmatpush1.msra.mxu0 0.0
        %1157 = vmatprep.subr.mxu0 0.0
        %1158 = vmatpush1.msra.mxu0 0.0
        %1159 = vmatprep.subr.mxu0 0.0
        %1160 = vmatpush1.msra.mxu0 0.0
        %1161 = vmatprep.subr.mxu0 0.0
        %1162 = vmatpush1.msra.mxu0 0.0
        %1163 = vmatprep.subr.mxu0 0.0
        %1164 = vmatpush1.msra.mxu0 0.0
        %1165 = vmatprep.subr.mxu0 0.0
        %1166 = vmatpush1.msra.mxu0 0.0
        %1167 = vmatprep.subr.mxu0 0.0
        %1168 = vmatpush1.msra.mxu0 0.0
        %1169 = vmatprep.subr.mxu0 0.0
        %1170 = vmatpush1.msra.mxu0 0.0
        %1171 = vmatprep.subr.mxu0 0.0
        %1172 = vmatpush1.msra.mxu0 0.0
        %1173 = vmatprep.subr.mxu0 0.0
        %1174 = vmatpush1.msra.mxu0 0.0
        %1175 = vmatprep.subr.mxu0 0.0
        %1176 = vmatpush1.msra.mxu0 0.0
        %1177 = vmatprep.subr.mxu0 0.0
        %1178 = vmatpush1.msra.mxu0 0.0
        %1179 = vmatprep.subr.mxu0 0.0
        %1180 = vmatpush1.msra.mxu0 0.0
        %1181 = vmatprep.mubr.f32.mxu0 0.0
        %1182 = vmatmul.mubr.f32.gmra.mrb[0].mxu0 %v981
        %v1183 = vpop.f32.mrb[0].mxu0
        %v1184 = vadd.f32 %v943, %v1183
        %v1185 = vpop.f32.mrb[0].mxu0
        %v1186 = vadd.f32 %v943, %v1185
        %1187 = vmatprep.mubr.f32.mxu0 0.0
        %1188 = vmatmul.mubr.f32.gmra.mrb[0].mxu0 %v984
        %v1189 = vpop.f32.mrb[0].mxu0
        %v1190 = vadd.f32 %v948, %v1189
        %v1191 = vpop.f32.mrb[0].mxu0
        %v1192 = vadd.f32 %v948, %v1191
        %1193 = vmatprep.mubr.f32.mxu0 0.0
        %1194 = vmatmul.mubr.f32.gmra.mrb[0].mxu0 %v987
        %v1195 = vpop.f32.mrb[0].mxu0
        %v1196 = vadd.f32 %v953, %v1195
        %v1197 = vpop.f32.mrb[0].mxu0
        %v1198 = vadd.f32 %v953, %v1197
        %1199 = vmatprep.mubr.f32.mxu0 0.0
        %1200 = vmatmul.mubr.f32.gmra.mrb[0].mxu0 %v990
        %v1201 = vpop.f32.mrb[0].mxu0
        %v1202 = vadd.f32 %v958, %v1201
        %v1203 = vpop.f32.mrb[0].mxu0
        %v1204 = vadd.f32 %v958, %v1203
        %1205 = vmatprep.mubr.f32.mxu0 0.0
        %1206 = vmatmul.mubr.f32.gmra.mrb[0].mxu0 %v993
        %v1207 = vpop.f32.mrb[0].mxu0
        %v1208 = vadd.f32 %v963, %v1207
        %v1209 = vpop.f32.mrb[0].mxu0
        %v1210 = vadd.f32 %v963, %v1209
        %1211 = vmatprep.mubr.f32.mxu0 0.0
        %1212 = vmatmul.mubr.f32.gmra.mrb[0].mxu0 %v996
        %v1213 = vpop.f32.mrb[0].mxu0
        %v1214 = vadd.f32 %v968, %v1213
        %v1215 = vpop.f32.mrb[0].mxu0
        %v1216 = vadd.f32 %v968, %v1215
        %1217 = vmatprep.mubr.f32.mxu0 0.0
        %1218 = vmatmul.mubr.f32.gmra.mrb[0].mxu0 %v999
        %v1219 = vpop.f32.mrb[0].mxu0
        %v1220 = vadd.f32 %v973, %v1219
        %v1221 = vpop.f32.mrb[0].mxu0
        %v1222 = vadd.f32 %v973, %v1221
        %1223 = vmatprep.mubr.f32.mxu0 0.0
        %1224 = vmatmul.mubr.f32.gmra.mrb[0].mxu0 %v1002
        %v1225 = vpop.f32.mrb[0].mxu0
        %v1226 = vadd.f32 %v978, %v1225
        %v1227 = vpop.f32.mrb[0].mxu0
        %v1228 = vadd.f32 %v978, %v1227
        %1229 = vdwg.mxu0
        %1230 = vmatprep.subr.mxu0 %v865
        %1231 = vmatpush1.msra.mxu0 %v864
        %1232 = vmatprep.subr.mxu0 %v873
        %1233 = vmatpush1.msra.mxu0 %v872
        %1234 = vmatprep.subr.mxu0 %v881
        %1235 = vmatpush1.msra.mxu0 %v880
        %1236 = vmatprep.subr.mxu0 %v889
        %1237 = vmatpush1.msra.mxu0 %v888
        %1238 = vmatprep.subr.mxu0 %v897
        %1239 = vmatpush1.msra.mxu0 %v896
        %1240 = vmatprep.subr.mxu0 %v905
        %1241 = vmatpush1.msra.mxu0 %v904
        %1242 = vmatprep.subr.mxu0 %v913
        %1243 = vmatpush1.msra.mxu0 %v912
        %1244 = vmatprep.subr.mxu0 %v921
        %1245 = vmatpush1.msra.mxu0 %v920
        %1246 = vmatprep.subr.mxu0 0.0
        %1247 = vmatpush1.msra.mxu0 0.0
        %1248 = vmatprep.subr.mxu0 0.0
        %1249 = vmatpush1.msra.mxu0 0.0
        %1250 = vmatprep.subr.mxu0 0.0
        %1251 = vmatpush1.msra.mxu0 0.0
        %1252 = vmatprep.subr.mxu0 0.0
        %1253 = vmatpush1.msra.mxu0 0.0
        %1254 = vmatprep.subr.mxu0 0.0
        %1255 = vmatpush1.msra.mxu0 0.0
        %1256 = vmatprep.subr.mxu0 0.0
        %1257 = vmatpush1.msra.mxu0 0.0
        %1258 = vmatprep.subr.mxu0 0.0
        %1259 = vmatpush1.msra.mxu0 0.0
        %1260 = vmatprep.subr.mxu0 0.0
        %1261 = vmatpush1.msra.mxu0 0.0
        %1262 = vmatprep.subr.mxu0 0.0
        %1263 = vmatpush1.msra.mxu0 0.0
        %1264 = vmatprep.subr.mxu0 0.0
        %1265 = vmatpush1.msra.mxu0 0.0
        %1266 = vmatprep.subr.mxu0 0.0
        %1267 = vmatpush1.msra.mxu0 0.0
        %1268 = vmatprep.subr.mxu0 0.0
        %1269 = vmatpush1.msra.mxu0 0.0
        %1270 = vmatprep.subr.mxu0 0.0
        %1271 = vmatpush1.msra.mxu0 0.0
        %1272 = vmatprep.subr.mxu0 0.0
        %1273 = vmatpush1.msra.mxu0 0.0
        %1274 = vmatprep.subr.mxu0 0.0
        %1275 = vmatpush1.msra.mxu0 0.0
        %1276 = vmatprep.subr.mxu0 0.0
        %1277 = vmatpush1.msra.mxu0 0.0
        %1278 = vmatprep.subr.mxu0 0.0
        %1279 = vmatpush1.msra.mxu0 0.0
        %1280 = vmatprep.subr.mxu0 0.0
        %1281 = vmatpush1.msra.mxu0 0.0
        %1282 = vmatprep.subr.mxu0 0.0
        %1283 = vmatpush1.msra.mxu0 0.0
        %1284 = vmatprep.subr.mxu0 0.0
        %1285 = vmatpush1.msra.mxu0 0.0
        %1286 = vmatprep.subr.mxu0 0.0
        %1287 = vmatpush1.msra.mxu0 0.0
        %1288 = vmatprep.subr.mxu0 0.0
        %1289 = vmatpush1.msra.mxu0 0.0
        %1290 = vmatprep.subr.mxu0 0.0
        %1291 = vmatpush1.msra.mxu0 0.0
        %1292 = vmatprep.subr.mxu0 0.0
        %1293 = vmatpush1.msra.mxu0 0.0
        %1294 = vmatprep.mubr.f32.mxu0 0.0
        %1295 = vmatmul.mubr.f32.gmra.mrb[0].mxu0 %v981
        %v1296 = vpop.f32.mrb[0].mxu0
        %v1297 = vadd.f32 %v943, %v1296
        %v1298 = vpop.f32.mrb[0].mxu0
        %v1299 = vadd.f32 %v943, %v1298
        %1300 = vmatprep.mubr.f32.mxu0 0.0
        %1301 = vmatmul.mubr.f32.gmra.mrb[0].mxu0 %v984
        %v1302 = vpop.f32.mrb[0].mxu0
        %v1303 = vadd.f32 %v948, %v1302
        %v1304 = vpop.f32.mrb[0].mxu0
        %v1305 = vadd.f32 %v948, %v1304
        %1306 = vmatprep.mubr.f32.mxu0 0.0
        %1307 = vmatmul.mubr.f32.gmra.mrb[0].mxu0 %v987
        %v1308 = vpop.f32.mrb[0].mxu0
        %v1309 = vadd.f32 %v953, %v1308
        %v1310 = vpop.f32.mrb[0].mxu0
        %v1311 = vadd.f32 %v953, %v1310
        %1312 = vmatprep.mubr.f32.mxu0 0.0
        %1313 = vmatmul.mubr.f32.gmra.mrb[0].mxu0 %v990
        %v1314 = vpop.f32.mrb[0].mxu0
        %v1315 = vadd.f32 %v958, %v1314
        %v1316 = vpop.f32.mrb[0].mxu0
        %v1317 = vadd.f32 %v958, %v1316
        %1318 = vmatprep.mubr.f32.mxu0 0.0
        %1319 = vmatmul.mubr.f32.gmra.mrb[0].mxu0 %v993
        %v1320 = vpop.f32.mrb[0].mxu0
        %v1321 = vadd.f32 %v963, %v1320
        %v1322 = vpop.f32.mrb[0].mxu0
        %v1323 = vadd.f32 %v963, %v1322
        %1324 = vmatprep.mubr.f32.mxu0 0.0
        %1325 = vmatmul.mubr.f32.gmra.mrb[0].mxu0 %v996
        %v1326 = vpop.f32.mrb[0].mxu0
        %v1327 = vadd.f32 %v968, %v1326
        %v1328 = vpop.f32.mrb[0].mxu0
        %v1329 = vadd.f32 %v968, %v1328
        %1330 = vmatprep.mubr.f32.mxu0 0.0
        %1331 = vmatmul.mubr.f32.gmra.mrb[0].mxu0 %v999
        %v1332 = vpop.f32.mrb[0].mxu0
        %v1333 = vadd.f32 %v973, %v1332
        %v1334 = vpop.f32.mrb[0].mxu0
        %v1335 = vadd.f32 %v973, %v1334
        %1336 = vmatprep.mubr.f32.mxu0 0.0
        %1337 = vmatmul.mubr.f32.gmra.mrb[0].mxu0 %v1002
        %v1338 = vpop.f32.mrb[0].mxu0
        %v1339 = vadd.f32 %v978, %v1338
        %v1340 = vpop.f32.mrb[0].mxu0
        %v1341 = vadd.f32 %v978, %v1340
        %1342 = vdwg.mxu0
        %1343 = vmatprep.subr.mxu0 %v867
        %1344 = vmatpush1.msra.mxu0 %v866
        %1345 = vmatprep.subr.mxu0 %v875
        %1346 = vmatpush1.msra.mxu0 %v874
        %1347 = vmatprep.subr.mxu0 %v883
        %1348 = vmatpush1.msra.mxu0 %v882
        %1349 = vmatprep.subr.mxu0 %v891
        %1350 = vmatpush1.msra.mxu0 %v890
        %1351 = vmatprep.subr.mxu0 %v899
        %1352 = vmatpush1.msra.mxu0 %v898
        %1353 = vmatprep.subr.mxu0 %v907
        %1354 = vmatpush1.msra.mxu0 %v906
        %1355 = vmatprep.subr.mxu0 %v915
        %1356 = vmatpush1.msra.mxu0 %v914
        %1357 = vmatprep.subr.mxu0 %v923
        %1358 = vmatpush1.msra.mxu0 %v922
        %1359 = vmatprep.subr.mxu0 0.0
        %1360 = vmatpush1.msra.mxu0 0.0
        %1361 = vmatprep.subr.mxu0 0.0
        %1362 = vmatpush1.msra.mxu0 0.0
        %1363 = vmatprep.subr.mxu0 0.0
        %1364 = vmatpush1.msra.mxu0 0.0
        %1365 = vmatprep.subr.mxu0 0.0
        %1366 = vmatpush1.msra.mxu0 0.0
        %1367 = vmatprep.subr.mxu0 0.0
        %1368 = vmatpush1.msra.mxu0 0.0
        %1369 = vmatprep.subr.mxu0 0.0
        %1370 = vmatpush1.msra.mxu0 0.0
        %1371 = vmatprep.subr.mxu0 0.0
        %1372 = vmatpush1.msra.mxu0 0.0
        %1373 = vmatprep.subr.mxu0 0.0
        %1374 = vmatpush1.msra.mxu0 0.0
        %1375 = vmatprep.subr.mxu0 0.0
        %1376 = vmatpush1.msra.mxu0 0.0
        %1377 = vmatprep.subr.mxu0 0.0
        %1378 = vmatpush1.msra.mxu0 0.0
        %1379 = vmatprep.subr.mxu0 0.0
        %1380 = vmatpush1.msra.mxu0 0.0
        %1381 = vmatprep.subr.mxu0 0.0
        %1382 = vmatpush1.msra.mxu0 0.0
        %1383 = vmatprep.subr.mxu0 0.0
        %1384 = vmatpush1.msra.mxu0 0.0
        %1385 = vmatprep.subr.mxu0 0.0
        %1386 = vmatpush1.msra.mxu0 0.0
        %1387 = vmatprep.subr.mxu0 0.0
        %1388 = vmatpush1.msra.mxu0 0.0
        %1389 = vmatprep.subr.mxu0 0.0
        %1390 = vmatpush1.msra.mxu0 0.0
        %1391 = vmatprep.subr.mxu0 0.0
        %1392 = vmatpush1.msra.mxu0 0.0
        %1393 = vmatprep.subr.mxu0 0.0
        %1394 = vmatpush1.msra.mxu0 0.0
        %1395 = vmatprep.subr.mxu0 0.0
        %1396 = vmatpush1.msra.mxu0 0.0
        %1397 = vmatprep.subr.mxu0 0.0
        %1398 = vmatpush1.msra.mxu0 0.0
        %1399 = vmatprep.subr.mxu0 0.0
        %1400 = vmatpush1.msra.mxu0 0.0
        %1401 = vmatprep.subr.mxu0 0.0
        %1402 = vmatpush1.msra.mxu0 0.0
        %1403 = vmatprep.subr.mxu0 0.0
        %1404 = vmatpush1.msra.mxu0 0.0
        %1405 = vmatprep.subr.mxu0 0.0
        %1406 = vmatpush1.msra.mxu0 0.0
        %1407 = vmatprep.mubr.f32.mxu0 0.0
        %1408 = vmatmul.mubr.f32.gmra.mrb[0].mxu0 %v981
        %v1409 = vpop.f32.mrb[0].mxu0
        %v1410 = vadd.f32 %v943, %v1409
        %v1411 = vpop.f32.mrb[0].mxu0
        %v1412 = vadd.f32 %v943, %v1411
        %1413 = vmatprep.mubr.f32.mxu0 0.0
        %1414 = vmatmul.mubr.f32.gmra.mrb[0].mxu0 %v984
        %v1415 = vpop.f32.mrb[0].mxu0
        %v1416 = vadd.f32 %v948, %v1415
        %v1417 = vpop.f32.mrb[0].mxu0
        %v1418 = vadd.f32 %v948, %v1417
        %1419 = vmatprep.mubr.f32.mxu0 0.0
        %1420 = vmatmul.mubr.f32.gmra.mrb[0].mxu0 %v987
        %v1421 = vpop.f32.mrb[0].mxu0
        %v1422 = vadd.f32 %v953, %v1421
        %v1423 = vpop.f32.mrb[0].mxu0
        %v1424 = vadd.f32 %v953, %v1423
        %1425 = vmatprep.mubr.f32.mxu0 0.0
        %1426 = vmatmul.mubr.f32.gmra.mrb[0].mxu0 %v990
        %v1427 = vpop.f32.mrb[0].mxu0
        %v1428 = vadd.f32 %v958, %v1427
        %v1429 = vpop.f32.mrb[0].mxu0
        %v1430 = vadd.f32 %v958, %v1429
        %1431 = vmatprep.mubr.f32.mxu0 0.0
        %1432 = vmatmul.mubr.f32.gmra.mrb[0].mxu0 %v993
        %v1433 = vpop.f32.mrb[0].mxu0
        %v1434 = vadd.f32 %v963, %v1433
        %v1435 = vpop.f32.mrb[0].mxu0
        %v1436 = vadd.f32 %v963, %v1435
        %1437 = vmatprep.mubr.f32.mxu0 0.0
        %1438 = vmatmul.mubr.f32.gmra.mrb[0].mxu0 %v996
        %v1439 = vpop.f32.mrb[0].mxu0
        %v1440 = vadd.f32 %v968, %v1439
        %v1441 = vpop.f32.mrb[0].mxu0
        %v1442 = vadd.f32 %v968, %v1441
        %1443 = vmatprep.mubr.f32.mxu0 0.0
        %1444 = vmatmul.mubr.f32.gmra.mrb[0].mxu0 %v999
        %v1445 = vpop.f32.mrb[0].mxu0
        %v1446 = vadd.f32 %v973, %v1445
        %v1447 = vpop.f32.mrb[0].mxu0
        %v1448 = vadd.f32 %v973, %v1447
        %1449 = vmatprep.mubr.f32.mxu0 0.0
        %1450 = vmatmul.mubr.f32.gmra.mrb[0].mxu0 %v1002
        %v1451 = vpop.f32.mrb[0].mxu0
        %v1452 = vadd.f32 %v978, %v1451
        %v1453 = vpop.f32.mrb[0].mxu0
        %v1454 = vadd.f32 %v978, %v1453
        %1455 = vdwg.mxu0
        %v1456 = vadd.f32 %v263, %v1071
        %v1457 = vadd.f32 %v264, %v1073
        %v1458 = vadd.f32 %v265, %v1184
        %v1459 = vadd.f32 %v266, %v1186
        %v1460 = vadd.f32 %v267, %v1297
        %v1461 = vadd.f32 %v268, %v1299
        %v1462 = vadd.f32 %v269, %v1410
        %v1463 = vadd.f32 %v270, %v1412
        %v1464 = vadd.f32 %v271, %v1077
        %v1465 = vadd.f32 %v272, %v1079
        %v1466 = vadd.f32 %v273, %v1190
        %v1467 = vadd.f32 %v274, %v1192
        %v1468 = vadd.f32 %v275, %v1303
        %v1469 = vadd.f32 %v276, %v1305
        %v1470 = vadd.f32 %v277, %v1416
        %v1471 = vadd.f32 %v278, %v1418
        %v1472 = vadd.f32 %v279, %v1083
        %v1473 = vadd.f32 %v280, %v1085
        %v1474 = vadd.f32 %v281, %v1196
        %v1475 = vadd.f32 %v282, %v1198
        %v1476 = vadd.f32 %v283, %v1309
        %v1477 = vadd.f32 %v284, %v1311
        %v1478 = vadd.f32 %v285, %v1422
        %v1479 = vadd.f32 %v286, %v1424
        %v1480 = vadd.f32 %v287, %v1089
        %v1481 = vadd.f32 %v288, %v1091
        %v1482 = vadd.f32 %v289, %v1202
        %v1483 = vadd.f32 %v290, %v1204
        %v1484 = vadd.f32 %v291, %v1315
        %v1485 = vadd.f32 %v292, %v1317
        %v1486 = vadd.f32 %v293, %v1428
        %v1487 = vadd.f32 %v294, %v1430
        %v1488 = vadd.f32 %v295, %v1095
        %v1489 = vadd.f32 %v296, %v1097
        %v1490 = vadd.f32 %v297, %v1208
        %v1491 = vadd.f32 %v298, %v1210
        %v1492 = vadd.f32 %v299, %v1321
        %v1493 = vadd.f32 %v300, %v1323
        %v1494 = vadd.f32 %v301, %v1434
        %v1495 = vadd.f32 %v302, %v1436
        %v1496 = vadd.f32 %v303, %v1101
        %v1497 = vadd.f32 %v304, %v1103
        %v1498 = vadd.f32 %v305, %v1214
        %v1499 = vadd.f32 %v306, %v1216
        %v1500 = vadd.f32 %v307, %v1327
        %v1501 = vadd.f32 %v308, %v1329
        %v1502 = vadd.f32 %v309, %v1440
        %v1503 = vadd.f32 %v310, %v1442
        %v1504 = vadd.f32 %v311, %v1107
        %v1505 = vadd.f32 %v312, %v1109
        %v1506 = vadd.f32 %v313, %v1220
        %v1507 = vadd.f32 %v314, %v1222
        %v1508 = vadd.f32 %v315, %v1333
        %v1509 = vadd.f32 %v316, %v1335
        %v1510 = vadd.f32 %v317, %v1446
        %v1511 = vadd.f32 %v318, %v1448
        %v1512 = vadd.f32 %v319, %v1113
        %v1513 = vadd.f32 %v320, %v1115
        %v1514 = vadd.f32 %v321, %v1226
        %v1515 = vadd.f32 %v322, %v1228
        %v1516 = vadd.f32 %v323, %v1339
        %v1517 = vadd.f32 %v324, %v1341
        %v1518 = vadd.f32 %v325, %v1452
        %v1519 = vadd.f32 %v326, %v1454
        %1520 = vst [vmem:[%s260] sm:$0xff] %v1456
        %1521 = vst [vmem:[%s260 + $0x8] sm:$0xff] %v1457
        %1522 = vst [vmem:[%s260 + $0x10] sm:$0xff] %v1458
        %1523 = vst [vmem:[%s260 + $0x18] sm:$0xff] %v1459
        %1524 = vst [vmem:[%s260 + $0x20] sm:$0xff] %v1460
        %1525 = vst [vmem:[%s260 + $0x28] sm:$0xff] %v1461
        %1526 = vst [vmem:[%s260 + $0x30] sm:$0xff] %v1462
        %1527 = vst [vmem:[%s260 + $0x38] sm:$0xff] %v1463
        %1528 = vst [vmem:[%s260 + $0x40] sm:$0xff] %v1464
        %1529 = vst [vmem:[%s260 + $0x48] sm:$0xff] %v1465
        %1530 = vst [vmem:[%s260 + $0x50] sm:$0xff] %v1466
        %1531 = vst [vmem:[%s260 + $0x58] sm:$0xff] %v1467
        %1532 = vst [vmem:[%s260 + $0x60] sm:$0xff] %v1468
        %1533 = vst [vmem:[%s260 + $0x68] sm:$0xff] %v1469
        %1534 = vst [vmem:[%s260 + $0x70] sm:$0xff] %v1470
        %1535 = vst [vmem:[%s260 + $0x78] sm:$0xff] %v1471
        %1536 = vst [vmem:[%s260 + $0x80] sm:$0xff] %v1472
        %1537 = vst [vmem:[%s260 + $0x88] sm:$0xff] %v1473
        %1538 = vst [vmem:[%s260 + $0x90] sm:$0xff] %v1474
        %1539 = vst [vmem:[%s260 + $0x98] sm:$0xff] %v1475
        %1540 = vst [vmem:[%s260 + $0xa0] sm:$0xff] %v1476
        %1541 = vst [vmem:[%s260 + $0xa8] sm:$0xff] %v1477
        %1542 = vst [vmem:[%s260 + $0xb0] sm:$0xff] %v1478
        %1543 = vst [vmem:[%s260 + $0xb8] sm:$0xff] %v1479
        %1544 = vst [vmem:[%s260 + $0xc0] sm:$0xff] %v1480
        %1545 = vst [vmem:[%s260 + $0xc8] sm:$0xff] %v1481
        %1546 = vst [vmem:[%s260 + $0xd0] sm:$0xff] %v1482
        %1547 = vst [vmem:[%s260 + $0xd8] sm:$0xff] %v1483
        %1548 = vst [vmem:[%s260 + $0xe0] sm:$0xff] %v1484
        %1549 = vst [vmem:[%s260 + $0xe8] sm:$0xff] %v1485
        %1550 = vst [vmem:[%s260 + $0xf0] sm:$0xff] %v1486
        %1551 = vst [vmem:[%s260 + $0xf8] sm:$0xff] %v1487
        %1552 = vst [vmem:[%s260 + $0x100] sm:$0xff] %v1488
        %1553 = vst [vmem:[%s260 + $0x108] sm:$0xff] %v1489
        %1554 = vst [vmem:[%s260 + $0x110] sm:$0xff] %v1490
        %1555 = vst [vmem:[%s260 + $0x118] sm:$0xff] %v1491
        %1556 = vst [vmem:[%s260 + $0x120] sm:$0xff] %v1492
        %1557 = vst [vmem:[%s260 + $0x128] sm:$0xff] %v1493
        %1558 = vst [vmem:[%s260 + $0x130] sm:$0xff] %v1494
        %1559 = vst [vmem:[%s260 + $0x138] sm:$0xff] %v1495
        %1560 = vst [vmem:[%s260 + $0x140] sm:$0xff] %v1496
        %1561 = vst [vmem:[%s260 + $0x148] sm:$0xff] %v1497
        %1562 = vst [vmem:[%s260 + $0x150] sm:$0xff] %v1498
        %1563 = vst [vmem:[%s260 + $0x158] sm:$0xff] %v1499
        %1564 = vst [vmem:[%s260 + $0x160] sm:$0xff] %v1500
        %1565 = vst [vmem:[%s260 + $0x168] sm:$0xff] %v1501
        %1566 = vst [vmem:[%s260 + $0x170] sm:$0xff] %v1502
        %1567 = vst [vmem:[%s260 + $0x178] sm:$0xff] %v1503
        %1568 = vst [vmem:[%s260 + $0x180] sm:$0xff] %v1504
        %1569 = vst [vmem:[%s260 + $0x188] sm:$0xff] %v1505
        %1570 = vst [vmem:[%s260 + $0x190] sm:$0xff] %v1506
        %1571 = vst [vmem:[%s260 + $0x198] sm:$0xff] %v1507
        %1572 = vst [vmem:[%s260 + $0x1a0] sm:$0xff] %v1508
        %1573 = vst [vmem:[%s260 + $0x1a8] sm:$0xff] %v1509
        %1574 = vst [vmem:[%s260 + $0x1b0] sm:$0xff] %v1510
        %1575 = vst [vmem:[%s260 + $0x1b8] sm:$0xff] %v1511
        %1576 = vst [vmem:[%s260 + $0x1c0] sm:$0xff] %v1512
        %1577 = vst [vmem:[%s260 + $0x1c8] sm:$0xff] %v1513
        %1578 = vst [vmem:[%s260 + $0x1d0] sm:$0xff] %v1514
        %1579 = vst [vmem:[%s260 + $0x1d8] sm:$0xff] %v1515
        %1580 = vst [vmem:[%s260 + $0x1e0] sm:$0xff] %v1516
        %1581 = vst [vmem:[%s260 + $0x1e8] sm:$0xff] %v1517
        %1582 = vst [vmem:[%s260 + $0x1f0] sm:$0xff] %v1518
        %1583 = vst [vmem:[%s260 + $0x1f8] sm:$0xff] %v1519
        %s1584 = sand.u32 %s156, 1
        %s1585 = scalar_lea.sflag [#allocation4], %s1584
        %s1586 = sand.u32 %s156, 1
        %s1587 = smul.addr %s1586, 512
        %s1588 = scalar_lea.vmem [#allocation5], %s1587
        // Predicated region
        $region45: #{tpu_custom_call.1} parent=39 // pred_check
          %p1589 = pneg %p166
        $region46: #{tpu_custom_call.1} parent=39 // pred_check_branch
          %1591 = sbr.rel (%p1589) target = $region48
        $region47: #{tpu_custom_call.1} parent=39 // pred_region
          %s1592 = smul.u32 8, %s27
          %s1594 = ssub.s32 8192, 8192
          %1595 = vsyncadd %s1585, %s1594
          %s1596 = smul.addr %s26, 64
          %s1597 = sadd.s32 %s1592, %s1596
          %s1598 = smul.addr %s1597, 128
          %s1599 = scalar_lea.hbm %s5, %s1598
          %s1600 = sshll.u32 %s1588, 4
          %s1601 = int_to_ptr.vmem [resolvable:$true] %s1600
          %1606 = dma.vmem_to_hbm [thread:$0]  %s1601, 8192, %s1599, %s1585, 1024, 1024, 64
        $region48: #{tpu_custom_call.1} parent=39 // pred_fallthru
          _
      $region40: #{tpu_custom_call.1} parent=5 // pred_fallthru
        _
      %p1607 = scmp.le.s32.totalorder 2, %s17
      // Predicated region
      $region49: #{tpu_custom_call.1} parent=5 // pred_check
        %p1608 = pneg %p1607
      $region50: #{tpu_custom_call.1} parent=5 // pred_check_branch
        %1610 = sbr.rel (%p1608) target = $region52
      $region51: #{tpu_custom_call.1} parent=5 // pred_region
        %s1611 = ssub.s32 %s17, 2
        // Predicated region
        $region53: #{tpu_custom_call.1} parent=51 // pred_check
          %p1612 = pneg %p172
        $region54: #{tpu_custom_call.1} parent=51 // pred_check_branch
          %1614 = sbr.rel (%p1612) target = $region56
        $region55: #{tpu_custom_call.1} parent=51 // pred_region
          %s1615 = sand.u32 %s157, 1
          %s1616 = scalar_lea.sflag [#allocation4], %s1615
          %s1617 = sand.u32 %s157, 1
          %s1618 = smul.addr %s1617, 512
          %s1619 = scalar_lea.vmem [#allocation5], %s1618
          %1620 = dma.done %s1616, 8192
        $region56: #{tpu_custom_call.1} parent=51 // pred_fallthru
          _
      $region52: #{tpu_custom_call.1} parent=5 // pred_fallthru
        _
    $region6: #{tpu_custom_call.1} parent=1 // loop_footer
      %s21 = sadd.s32 1, %s17
    $region7: #{tpu_custom_call.1} parent=1 // loop_footer_branch
      %16 = sbr.rel target = $region3
    $region8: #{tpu_custom_call.1} parent=1 // loop_exit
      _
    %1621 = vsyncpa [#allocation3], 1
    %s1622 = scalar_lea.sflag [#allocation3], 1
    %1623 = vsyncpa %s1622, 1
    %1624 = vsyncpa [#allocation4], 1
    %s1625 = scalar_lea.sflag [#allocation4], 1
    %1626 = vsyncpa %s1625, 1

</llo_original>
